<compile_context>
chip_gen: v7x
topology: tpu7x:2x2x1
jax: 0.10.0
libtpu: 0.0.40
codegen_flags: <defaults>
</compile_context>

<pallas_src>
import functools
import math

import jax
import jax.numpy as jnp
from jax.experimental import pallas as pl
from jax.experimental.pallas import tpu as pltpu


# --------------------------------------------------------------------------
# Kernels
# --------------------------------------------------------------------------
def _gelu(h, approximate):
    if approximate:
        # tanh-approx GELU: transcendental lands on the (otherwise idle) EUP.
        return jax.nn.gelu(h, approximate=True)
    # Exact erf GELU in f32 -- matches torch.nn.functional.gelu's default.
    return 0.5 * h * (1.0 + jax.lax.erf(h * (1.0 / math.sqrt(2.0))))


def _mlp_kernel_resident(x_ref, w1_ref, b1_ref, w2_ref, b2_ref, o_ref, *,
                         approximate=False):
    # x_ref: (tm, dim) original dtype; w1_ref: (dim, hidden) bf16;
    # b1_ref: (1, hidden) f32; w2_ref: (hidden, dim) bf16; b2_ref: (1, dim) f32.
    x = x_ref[...].astype(w1_ref.dtype)            # in-kernel cast to bf16
    h = jnp.dot(x, w1_ref[...], preferred_element_type=jnp.float32)
    h = _gelu(h + b1_ref[...], approximate)
    y = jnp.dot(h.astype(w2_ref.dtype), w2_ref[...],
                preferred_element_type=jnp.float32) + b2_ref[...]
    # Dropout with p=0.0 (eval semantics) is the identity.
    o_ref[...] = y.astype(o_ref.dtype)


def _mlp_kernel_htiled(x_ref, w1_ref, b1_ref, w2_ref, b2_ref, o_ref, acc_ref, *,
                       approximate=False):
    # Hidden (reduction) axis is grid axis 1 ("arbitrary", last).
    j = pl.program_id(1)

    @pl.when(j == 0)
    def _init():
        acc_ref[...] = jnp.zeros_like(acc_ref)

    x = x_ref[...].astype(w1_ref.dtype)            # in-kernel cast to bf16
    h = jnp.dot(x, w1_ref[...], preferred_element_type=jnp.float32)
    h = _gelu(h + b1_ref[...], approximate)
    acc_ref[...] += jnp.dot(h.astype(w2_ref.dtype), w2_ref[...],
                            preferred_element_type=jnp.float32)

    @pl.when(j == pl.num_programs(1) - 1)
    def _finalize():
        o_ref[...] = (acc_ref[...] + b2_ref[...]).astype(o_ref.dtype)


# --------------------------------------------------------------------------
# Helpers
# --------------------------------------------------------------------------
def _round_up(a, b):
    return ((a + b - 1) // b) * b


def _pick_hidden_tile(hidden, th_max=1024):
    """Largest multiple of 128 that divides hidden (<= th_max); else hidden."""
    start = (min(th_max, hidden) // 128) * 128
    for th in range(start, 0, -128):
        if hidden % th == 0:
            return th
    return hidden


def _vmem_estimate_resident(tm, dim, hidden, x_isz, out_isz, w_bufs):
    c = 2  # bf16 bytes for weights / recast h
    return (2 * tm * dim * x_isz                       # x tile, double-buffered
            + 2 * tm * dim * out_isz                   # out tile, double-buffered
            + w_bufs * (dim * hidden + hidden * dim) * c   # W1, W2 resident
            + w_bufs * 8 * hidden * 4 + 2 * 8 * dim * 4    # biases (sublane pad)
            + tm * hidden * (4 + c))                   # f32 h temp + bf16 copy


def _vmem_estimate_htiled(tm, th, dim, x_isz, out_isz):
    c = 2
    return (2 * tm * dim * x_isz
            + 2 * tm * dim * out_isz
            + 2 * (dim * th + th * dim) * c            # streamed W1/W2 tiles
            + 2 * 8 * th * 4 + 2 * 8 * dim * 4         # biases (sublane pad)
            + tm * th * (4 + c)                        # f32 h temp + bf16 copy
            + tm * dim * 4)                            # f32 accumulator scratch


def _vmem_limit(est, vmem_cap):
    # Size from the actual tiles, floor 32 MiB, never above physical capacity.
    return int(min(max(int(est * 1.3) + (8 << 20), 32 << 20), vmem_cap))


# --------------------------------------------------------------------------
# pallas_call builders
# --------------------------------------------------------------------------
def _call_resident(x2d, w1c, b1_2d, w2c, b2_2d, *, tm, dim, hidden, out_dtype,
                   approximate_gelu, single_buffer_weights, vmem_limit_bytes,
                   cost_estimate):
    M = x2d.shape[0]
    w_kwargs = ({"pipeline_mode": pl.Buffered(1)}
                if single_buffer_weights else {})
    kernel = functools.partial(_mlp_kernel_resident, approximate=approximate_gelu)
    return pl.pallas_call(
        kernel,
        out_shape=jax.ShapeDtypeStruct((M, dim), out_dtype),
        grid_spec=pltpu.PrefetchScalarGridSpec(
            num_scalar_prefetch=0,
            grid=(pl.cdiv(M, tm),),
            in_specs=[
                pl.BlockSpec((tm, dim), lambda i: (i, 0)),                  # x rows
                pl.BlockSpec((dim, hidden), lambda i: (0, 0), **w_kwargs),  # W1^T
                pl.BlockSpec((1, hidden), lambda i: (0, 0)),                # b1
                pl.BlockSpec((hidden, dim), lambda i: (0, 0), **w_kwargs),  # W2^T
                pl.BlockSpec((1, dim), lambda i: (0, 0)),                   # b2
            ],
            out_specs=pl.BlockSpec((tm, dim), lambda i: (i, 0)),
        ),
        compiler_params=pltpu.CompilerParams(
            dimension_semantics=("parallel",),
            vmem_limit_bytes=vmem_limit_bytes),
        cost_estimate=cost_estimate,
    )(x2d, w1c, b1_2d, w2c, b2_2d)


def _call_hidden_tiled(x2d, w1c, b1_2d, w2c, b2_2d, *, tm, th, dim, hidden,
                       out_dtype, approximate_gelu, vmem_limit_bytes,
                       cost_estimate):
    M = x2d.shape[0]
    kernel = functools.partial(_mlp_kernel_htiled, approximate=approximate_gelu)
    return pl.pallas_call(
        kernel,
        out_shape=jax.ShapeDtypeStruct((M, dim), out_dtype),
        grid_spec=pltpu.PrefetchScalarGridSpec(
            num_scalar_prefetch=0,
            grid=(pl.cdiv(M, tm), hidden // th),
            in_specs=[
                pl.BlockSpec((tm, dim), lambda i, j: (i, 0)),   # x rows (const in j)
                pl.BlockSpec((dim, th), lambda i, j: (0, j)),   # W1^T hidden slab
                pl.BlockSpec((1, th), lambda i, j: (0, j)),     # b1 slab
                pl.BlockSpec((th, dim), lambda i, j: (j, 0)),   # W2^T hidden slab
                pl.BlockSpec((1, dim), lambda i, j: (0, 0)),    # b2
            ],
            out_specs=pl.BlockSpec((tm, dim), lambda i, j: (i, 0)),
            scratch_shapes=[pltpu.VMEM((tm, dim), jnp.float32)],
        ),
        compiler_params=pltpu.CompilerParams(
            dimension_semantics=("parallel", "arbitrary"),
            vmem_limit_bytes=vmem_limit_bytes),
        cost_estimate=cost_estimate,
    )(x2d, w1c, b1_2d, w2c, b2_2d)


# --------------------------------------------------------------------------
# Public wrapper
# --------------------------------------------------------------------------
def mlp_forward(x, w1, b1, w2, b2, *, tm=512, approximate_gelu=False,
                hidden_tile=None, force_hidden_tiling=False,
                single_buffer_weights=True):
    """x: (batch, seq, dim).  w1: (dim, hidden), b1: (hidden,),
    w2: (hidden, dim), b2: (dim,).  Returns (batch, seq, dim) in x.dtype."""
    batch, seq, dim = x.shape
    hidden = w1.shape[1]
    out_dtype = x.dtype
    M = batch * seq

    # No wrapper-side cast or pad of the activation stream.
    x2d = x.reshape(M, dim)
    w1c = w1.astype(jnp.bfloat16)
    w2c = w2.astype(jnp.bfloat16)
    b1_2d = b1.astype(jnp.float32).reshape(1, hidden)
    b2_2d = b2.astype(jnp.float32).reshape(1, dim)

    x_isz = jnp.dtype(x.dtype).itemsize
    out_isz = jnp.dtype(out_dtype).itemsize

    # Per-TC VMEM capacity (v5e/v6e: 128 MiB, v7x: 64 MiB).  This is a pure
    # capability probe; never used to swallow compile errors.
    try:
        vmem_cap = int(pltpu.get_tpu_info().vmem_capacity_bytes)
    except Exception:  # probe failure only -> assume the smallest (v7x) VMEM
        vmem_cap = 64 << 20
    budget = vmem_cap - (12 << 20)   # headroom for compiler-materialized temps

    # Row tile: multiple of 16 (bf16 packed-sublane tile is (16,128)); keep at
    # least 2 grid steps so the "parallel" M axis can split across 2 TCs.
    tm = max(16, (tm // 16) * 16)
    tm = min(tm, _round_up(M, 16))
    if M > 32:
        tm = min(tm, _round_up(pl.cdiv(M, 2), 16))
    tm = max(16, (tm // 16) * 16)

    use_htiled = (force_hidden_tiling or
                  _vmem_estimate_resident(tm, dim, hidden, x_isz, out_isz,
                                          w_bufs=2) > budget)

    flops = 4 * M * dim * hidden
    bytes_accessed = (x2d.size * x_isz + w1c.size * 2 + w2c.size * 2
                      + b1_2d.size * 4 + b2_2d.size * 4 + M * dim * out_isz)
    cost = pl.CostEstimate(flops=flops, transcendentals=M * hidden,
                           bytes_accessed=int(bytes_accessed))

    if not use_htiled:
        # Budget sized for DOUBLE-buffered weights so the Buffered(1) fallback
        # below never runs with an undersized vmem limit.
        est = _vmem_estimate_resident(tm, dim, hidden, x_isz, out_isz, w_bufs=2)
        kwargs = dict(tm=tm, dim=dim, hidden=hidden, out_dtype=out_dtype,
                      approximate_gelu=approximate_gelu,
                      vmem_limit_bytes=_vmem_limit(est, vmem_cap),
                      cost_estimate=cost)
        if single_buffer_weights:
            try:
                out2d = _call_resident(x2d, w1c, b1_2d, w2c, b2_2d,
                                       single_buffer_weights=True, **kwargs)
            except (pltpu.LoweringException, ValueError, TypeError,
                    NotImplementedError):
                # Toolchain rejected Buffered(1) on grid-invariant inputs;
                # identical semantics with default double-buffered weights.
                out2d = _call_resident(x2d, w1c, b1_2d, w2c, b2_2d,
                                       single_buffer_weights=False, **kwargs)
        else:
            out2d = _call_resident(x2d, w1c, b1_2d, w2c, b2_2d,
                                   single_buffer_weights=False, **kwargs)
    else:
        th = hidden_tile if hidden_tile is not None else _pick_hidden_tile(hidden)
        assert hidden % th == 0, "hidden_tile must divide hidden"
        # Shrink tm until the streamed-weight working set fits the budget.
        while tm > 64 and _vmem_estimate_htiled(tm, th, dim, x_isz,
                                                out_isz) > budget:
            tm = max(64, ((tm // 2) // 16) * 16)
        est = _vmem_estimate_htiled(tm, th, dim, x_isz, out_isz)
        out2d = _call_hidden_tiled(
            x2d, w1c, b1_2d, w2c, b2_2d, tm=tm, th=th, dim=dim, hidden=hidden,
            out_dtype=out_dtype, approximate_gelu=approximate_gelu,
            vmem_limit_bytes=_vmem_limit(est, vmem_cap), cost_estimate=cost)

    return out2d.reshape(batch, seq, dim)


def init_mlp_params(key, dim, mlp_ratio, dtype=jnp.float32):
    """Mirrors nn.Linear default init (uniform +/- 1/sqrt(fan_in)); weights are
    returned already transposed to (in_features, out_features)."""
    hidden = mlp_ratio * dim
    k1, k2, k3, k4 = jax.random.split(key, 4)
    bound1 = 1.0 / math.sqrt(dim)
    bound2 = 1.0 / math.sqrt(hidden)
    w1 = jax.random.uniform(k1, (dim, hidden), dtype, -bound1, bound1)
    b1 = jax.random.uniform(k2, (hidden,), dtype, -bound1, bound1)
    w2 = jax.random.uniform(k3, (hidden, dim), dtype, -bound2, bound2)
    b2 = jax.random.uniform(k4, (dim,), dtype, -bound2, bound2)
    return w1, b1, w2, b2


def mlp_reference(x, w1, b1, w2, b2):
    """Pure-JAX reference with the same bf16-compute / f32-accumulate numerics
    (exact erf GELU, dropout p=0 identity)."""
    f32 = jnp.float32
    b, s, d = x.shape
    xb = x.astype(jnp.bfloat16).astype(f32).reshape(-1, d)
    w1b = w1.astype(jnp.bfloat16).astype(f32)
    w2b = w2.astype(jnp.bfloat16).astype(f32)
    h = jax.nn.gelu(xb @ w1b + b1.astype(f32), approximate=False)
    h = h.astype(jnp.bfloat16).astype(f32)
    return (h @ w2b + b2.astype(f32)).reshape(b, s, d)


if __name__ == "__main__":
    dim, mlp_ratio = 128, 4          # hidden = 512 (lane-dense feature dims)
    batch, seq = 2, 256              # M = 512 rows

    key = jax.random.PRNGKey(0)
    kx, kx2, kp = jax.random.split(key, 3)
    x = jax.random.normal(kx, (batch, seq, dim), jnp.float32)
    w1, b1, w2, b2 = init_mlp_params(kp, dim, mlp_ratio)

    # Default (weights-resident) path.
    out = mlp_forward(x, w1, b1, w2, b2)
    jax.block_until_ready(out)
    assert out.shape == (batch, seq, dim) and out.dtype == x.dtype
    ref = mlp_reference(x, w1, b1, w2, b2)
    assert jnp.allclose(out.astype(jnp.float32), ref, atol=2e-2, rtol=2e-2), \
        "mismatch vs reference (resident path)"

    # Ragged M: no wrapper-side padding; boundary block masked by Pallas.
    xr = jax.random.normal(kx2, (1, 200, dim), jnp.float32)
    out_r = mlp_forward(xr, w1, b1, w2, b2)
    jax.block_until_ready(out_r)
    assert jnp.allclose(out_r.astype(jnp.float32),
                        mlp_reference(xr, w1, b1, w2, b2),
                        atol=2e-2, rtol=2e-2), "mismatch vs reference (ragged M)"

    # Hidden-tiled (v7x-style) path: streamed weights + f32 accumulator.
    out_h = mlp_forward(x, w1, b1, w2, b2, force_hidden_tiling=True,
                        hidden_tile=256)
    jax.block_until_ready(out_h)
    assert jnp.allclose(out_h.astype(jnp.float32), ref, atol=2e-2, rtol=2e-2), \
        "mismatch vs reference (hidden-tiled path)"

    print("KERNEL_OK")
</pallas_src>

<mosaic_0001>
module attributes {stable_mosaic.version = 11 : i64} {
  func.func @_mlp_kernel_resident(%arg0: i32, %arg1: memref<256x128xf32, #tpu.memory_space<vmem>>, %arg2: memref<128x512xbf16, #tpu.memory_space<vmem>>, %arg3: memref<1x512xf32, #tpu.memory_space<vmem>>, %arg4: memref<512x128xbf16, #tpu.memory_space<vmem>>, %arg5: memref<1x128xf32, #tpu.memory_space<vmem>>, %arg6: memref<256x128xf32, #tpu.memory_space<vmem>>) attributes {dimension_semantics = [#tpu.dimension_semantics<parallel>], iteration_bounds = array<i64: 2>, scalar_prefetch = 0 : i64, scratch_operands = 0 : i64, tpu.core_type = #tpu.core_type<tc>, window_params = [{transform_indices = @transform_0, window_bounds = array<i64: 256, 128>}, {pipeline_mode = #tpu.pipeline_mode<synchronous>, transform_indices = @transform_1, window_bounds = array<i64: 128, 512>}, {pipeline_mode = #tpu.pipeline_mode<synchronous>, transform_indices = @transform_2, window_bounds = array<i64: 1, 512>}, {pipeline_mode = #tpu.pipeline_mode<synchronous>, transform_indices = @transform_3, window_bounds = array<i64: 512, 128>}, {pipeline_mode = #tpu.pipeline_mode<synchronous>, transform_indices = @transform_4, window_bounds = array<i64: 1, 128>}, {transform_indices = @transform_5, window_bounds = array<i64: 256, 128>}]} {
    %c0 = arith.constant 0 : index
    %c0_0 = arith.constant 0 : index
    %0 = vector.load %arg1[%c0, %c0_0] : memref<256x128xf32, #tpu.memory_space<vmem>>, vector<256x128xf32>
    %1 = arith.truncf %0 : vector<256x128xf32> to vector<256x128xbf16>
    %c0_1 = arith.constant 0 : index
    %c0_2 = arith.constant 0 : index
    %2 = vector.load %arg2[%c0_1, %c0_2] : memref<128x512xbf16, #tpu.memory_space<vmem>>, vector<128x512xbf16>
    %cst = arith.constant dense<0.000000e+00> : vector<256x512xf32>
    %3 = tpu.matmul %1, %2, %cst {dimension_numbers = #tpu.dot_dimension_numbers<[1], [0], [0], [1], [0, 0, 1, 1], [], []>} : vector<256x128xbf16>, vector<128x512xbf16>, vector<256x512xf32> -> vector<256x512xf32>
    %c0_3 = arith.constant 0 : index
    %c0_4 = arith.constant 0 : index
    %4 = vector.load %arg3[%c0_3, %c0_4] : memref<1x512xf32, #tpu.memory_space<vmem>>, vector<1x512xf32>
    %5 = vector.broadcast %4 : vector<1x512xf32> to vector<256x512xf32>
    %6 = arith.addf %3, %5 : vector<256x512xf32>
    %cst_5 = arith.constant 5.000000e-01 : f32
    %7 = vector.broadcast %cst_5 : f32 to vector<256x512xf32>
    %8 = arith.mulf %7, %6 : vector<256x512xf32>
    %cst_6 = arith.constant 0.707106769 : f32
    %9 = vector.broadcast %cst_6 : f32 to vector<256x512xf32>
    %10 = arith.mulf %6, %9 : vector<256x512xf32>
    %11 = math.erf %10 : vector<256x512xf32>
    %cst_7 = arith.constant 1.000000e+00 : f32
    %12 = vector.broadcast %cst_7 : f32 to vector<256x512xf32>
    %13 = arith.addf %12, %11 : vector<256x512xf32>
    %14 = arith.mulf %8, %13 : vector<256x512xf32>
    %15 = arith.truncf %14 : vector<256x512xf32> to vector<256x512xbf16>
    %c0_8 = arith.constant 0 : index
    %c0_9 = arith.constant 0 : index
    %16 = vector.load %arg4[%c0_8, %c0_9] : memref<512x128xbf16, #tpu.memory_space<vmem>>, vector<512x128xbf16>
    %cst_10 = arith.constant dense<0.000000e+00> : vector<256x128xf32>
    %17 = tpu.matmul %15, %16, %cst_10 {dimension_numbers = #tpu.dot_dimension_numbers<[1], [0], [0], [1], [0, 0, 1, 1], [], []>} : vector<256x512xbf16>, vector<512x128xbf16>, vector<256x128xf32> -> vector<256x128xf32>
    %c0_11 = arith.constant 0 : index
    %c0_12 = arith.constant 0 : index
    %18 = vector.load %arg5[%c0_11, %c0_12] : memref<1x128xf32, #tpu.memory_space<vmem>>, vector<1x128xf32>
    %19 = vector.broadcast %18 : vector<1x128xf32> to vector<256x128xf32>
    %20 = arith.addf %17, %19 : vector<256x128xf32>
    %c0_13 = arith.constant 0 : index
    %c0_14 = arith.constant 0 : index
    %21 = vector.load %arg6[%c0_13, %c0_14] : memref<256x128xf32, #tpu.memory_space<vmem>>, vector<256x128xf32>
    tpu.vector_store %arg6[%c0_13, %c0_14], %20 {strides = array<i32>} : memref<256x128xf32, #tpu.memory_space<vmem>>, vector<256x128xf32>,
    return
  }
  func.func @transform_0(%arg0: i32) -> (i32, i32) {
    %c0_i32 = arith.constant 0 : i32
    %c0_i32_0 = arith.constant 0 : i32
    return %arg0, %c0_i32 : i32, i32
  }
  func.func @transform_1(%arg0: i32) -> (i32, i32) {
    %c0_i32 = arith.constant 0 : i32
    %c0_i32_0 = arith.constant 0 : i32
    %c0_i32_1 = arith.constant 0 : i32
    return %c0_i32, %c0_i32_0 : i32, i32
  }
  func.func @transform_2(%arg0: i32) -> (i32, i32) {
    %c0_i32 = arith.constant 0 : i32
    %c0_i32_0 = arith.constant 0 : i32
    %c0_i32_1 = arith.constant 0 : i32
    return %c0_i32, %c0_i32_0 : i32, i32
  }
  func.func @transform_3(%arg0: i32) -> (i32, i32) {
    %c0_i32 = arith.constant 0 : i32
    %c0_i32_0 = arith.constant 0 : i32
    %c0_i32_1 = arith.constant 0 : i32
    return %c0_i32, %c0_i32_0 : i32, i32
  }
  func.func @transform_4(%arg0: i32) -> (i32, i32) {
    %c0_i32 = arith.constant 0 : i32
    %c0_i32_0 = arith.constant 0 : i32
    %c0_i32_1 = arith.constant 0 : i32
    return %c0_i32, %c0_i32_0 : i32, i32
  }
  func.func @transform_5(%arg0: i32) -> (i32, i32) {
    %c0_i32 = arith.constant 0 : i32
    %c0_i32_0 = arith.constant 0 : i32
    return %arg0, %c0_i32 : i32, i32
  }
}

</mosaic_0001>

<llo_original>
// kernel: tpu_custom_call.1
$region0: #{tpu_custom_call.1}
  #allocation0 [shape = 'u32[]', space=smem, size = 0x4, offset = 0x4, fixed_abs, tag = 'smem constant byte address 0x4 - core index']
  #allocation1 [shape = 'u32[144,128]{1,0:T(1,128)}', space=vmem, size = 0x12000, scoped, tag = 'internal scratch']
  %s0 = inlined_call_operand.hbm [shape: f32[512,128], index: 0, kind: input, shape index: {}]
  %s1 = inlined_call_operand.hbm [shape: bf16[128,512], index: 1, kind: input, shape index: {}]
  %s2 = inlined_call_operand.vmem [shape: f32[1,512], index: 2, kind: input, shape index: {}]
  %s3 = inlined_call_operand.hbm [shape: bf16[512,128], index: 3, kind: input, shape index: {}]
  %s4 = inlined_call_operand.vmem [shape: f32[1,128], index: 4, kind: input, shape index: {}]
  %s5 = inlined_call_operand.hbm [shape: f32[512,128], index: 5, kind: output, shape index: {}]
  %s6 = sld [smem:[#allocation0]]
  $region65: #{tpu_custom_call.1} parent=0
    _
  %s8 = ssub.s32 1, %s6
  %s9 = scalar_select 0, %s8, %s6
  $region1: #{tpu_custom_call.1} parent=0
    #allocation2 [shape = 'u8[262144]{0}', space=vmem, size = 0x40000, scoped, tag = 'input window, operand 0']
    #allocation3 [shape = 's32[2]{0}', space=sflag, size = 0x8, scoped, tag = 'scoped memory for tpu_custom_call.1']
    #allocation4 [shape = 's32[2]{0}', space=sflag, size = 0x8, scoped, tag = 'scoped memory for tpu_custom_call.1']
    #allocation5 [shape = 'u8[131072]{0}', space=vmem, size = 0x20000, scoped, tag = 'input window, operand 1, single buffered']
    #allocation6 [shape = 's32[1]{0}', space=sflag, size = 0x4, scoped, tag = 'scoped memory for tpu_custom_call.1']
    #allocation7 [shape = 'u8[131072]{0}', space=vmem, size = 0x20000, scoped, tag = 'input window, operand 3, single buffered']
    #allocation8 [shape = 'u8[262144]{0}', space=vmem, size = 0x40000, scoped, tag = 'output window, operand 0']
    %10 = vsyncpa [#allocation3], 0
    %s11 = scalar_lea.sflag [#allocation3], 1
    %12 = vsyncpa %s11, 0
    %13 = vsyncpa [#allocation6], 0
    %14 = vsyncpa [#allocation4], 0
    %s15 = scalar_lea.sflag [#allocation4], 1
    %16 = vsyncpa %s15, 0
    loop: start=0, step=1, limit=4
    $region2: #{tpu_custom_call.1} parent=1 // loop_pre_header
      _
    $region3: #{tpu_custom_call.1} parent=1 // loop_header
      %s18 = sphi 0, %s22
      %p19 = scmp.ge.s32.totalorder %s18, 4
      %s28 = sphi 0, %s30
      %s31 = sphi 0, %s28
      %s32 = sphi 0, %s31
      %s48 = sphi 0, %s32
      %s52 = sphi 0, %s52
      %s54 = sphi 0, %s52
      %s55 = sphi 0, %s54
      %s69 = sphi 0, %s55
      %s73 = sphi 0, %s73
      %s75 = sphi 0, %s73
      %s76 = sphi 0, %s75
      %s90 = sphi 0, %s76
      %s94 = sphi 0, %s94
      %s96 = sphi 0, %s94
      %s97 = sphi 0, %s96
      %s111 = sphi 0, %s97
      %s115 = sphi 0, %s115
      %s117 = sphi 0, %s115
      %s118 = sphi 0, %s117
      %s132 = sphi 0, %s118
      %s138 = sphi 0, %s140
      %s141 = sphi 0, %s138
      %s142 = sphi 0, %s141
      %s158 = sphi 0, %s142
    $region4: #{tpu_custom_call.1} parent=1 // loop_header_branch
      %21 = sbr.rel (%p19) target = $region8
    $region5: #{tpu_custom_call.1} parent=1 // loop_body
      %s23 = ssub.s32 %s18, 1
      %s24 = ssub.s32 %s18, 2
      %s25 = sadd.s32 %s18, 1
      %s26 = ssub.s32 %s18, %s25
      %p27 = scmp.eq.s32.totalorder %s26, 0
      %s29 = sadd.s32 %s28, 1
      %s30 = scalar_select %p27, %s28, %s29
      %p33 = pneg %p27
      %p34 = scmp.eq.s32.totalorder %s18, 1
      %p35 = por %p33, %p34
      %p36 = scmp.ne.s32.totalorder %s28, %s31
      %p37 = scmp.eq.s32.totalorder %s18, 0
      %p38 = por %p36, %p37
      %p39 = scmp.ne.s32.totalorder %s28, %s31
      %p40 = scmp.eq.s32.totalorder %s23, 1
      %p41 = por %p39, %p40
      %p42 = scmp.ne.s32.totalorder %s31, %s32
      %p43 = scmp.eq.s32.totalorder %s23, 0
      %p44 = por %p42, %p43
      %p45 = scmp.ne.s32.totalorder %s31, %s32
      %p46 = scmp.eq.s32.totalorder %s24, 1
      %p47 = por %p45, %p46
      %p49 = scmp.ne.s32.totalorder %s32, %s48
      %p50 = scmp.eq.s32.totalorder %s24, 0
      %p51 = por %p49, %p50
      %s53 = sadd.s32 %s52, 1
      %p56 = scmp.eq.s32.totalorder %s18, 1
      %p57 = scmp.ne.s32.totalorder %s52, %s54
      %p58 = scmp.eq.s32.totalorder %s18, 0
      %p59 = por %p57, %p58
      %p60 = scmp.ne.s32.totalorder %s52, %s54
      %p61 = scmp.eq.s32.totalorder %s23, 1
      %p62 = por %p60, %p61
      %p63 = scmp.ne.s32.totalorder %s54, %s55
      %p64 = scmp.eq.s32.totalorder %s23, 0
      %p65 = por %p63, %p64
      %p66 = scmp.ne.s32.totalorder %s54, %s55
      %p67 = scmp.eq.s32.totalorder %s24, 1
      %p68 = por %p66, %p67
      %p70 = scmp.ne.s32.totalorder %s55, %s69
      %p71 = scmp.eq.s32.totalorder %s24, 0
      %p72 = por %p70, %p71
      %s74 = sadd.s32 %s73, 1
      %p77 = scmp.eq.s32.totalorder %s18, 1
      %p78 = scmp.ne.s32.totalorder %s73, %s75
      %p79 = scmp.eq.s32.totalorder %s18, 0
      %p80 = por %p78, %p79
      %p81 = scmp.ne.s32.totalorder %s73, %s75
      %p82 = scmp.eq.s32.totalorder %s23, 1
      %p83 = por %p81, %p82
      %p84 = scmp.ne.s32.totalorder %s75, %s76
      %p85 = scmp.eq.s32.totalorder %s23, 0
      %p86 = por %p84, %p85
      %p87 = scmp.ne.s32.totalorder %s75, %s76
      %p88 = scmp.eq.s32.totalorder %s24, 1
      %p89 = por %p87, %p88
      %p91 = scmp.ne.s32.totalorder %s76, %s90
      %p92 = scmp.eq.s32.totalorder %s24, 0
      %p93 = por %p91, %p92
      %s95 = sadd.s32 %s94, 1
      %p98 = scmp.eq.s32.totalorder %s18, 1
      %p99 = scmp.ne.s32.totalorder %s94, %s96
      %p100 = scmp.eq.s32.totalorder %s18, 0
      %p101 = por %p99, %p100
      %p102 = scmp.ne.s32.totalorder %s94, %s96
      %p103 = scmp.eq.s32.totalorder %s23, 1
      %p104 = por %p102, %p103
      %p105 = scmp.ne.s32.totalorder %s96, %s97
      %p106 = scmp.eq.s32.totalorder %s23, 0
      %p107 = por %p105, %p106
      %p108 = scmp.ne.s32.totalorder %s96, %s97
      %p109 = scmp.eq.s32.totalorder %s24, 1
      %p110 = por %p108, %p109
      %p112 = scmp.ne.s32.totalorder %s97, %s111
      %p113 = scmp.eq.s32.totalorder %s24, 0
      %p114 = por %p112, %p113
      %s116 = sadd.s32 %s115, 1
      %p119 = scmp.eq.s32.totalorder %s18, 1
      %p120 = scmp.ne.s32.totalorder %s115, %s117
      %p121 = scmp.eq.s32.totalorder %s18, 0
      %p122 = por %p120, %p121
      %p123 = scmp.ne.s32.totalorder %s115, %s117
      %p124 = scmp.eq.s32.totalorder %s23, 1
      %p125 = por %p123, %p124
      %p126 = scmp.ne.s32.totalorder %s117, %s118
      %p127 = scmp.eq.s32.totalorder %s23, 0
      %p128 = por %p126, %p127
      %p129 = scmp.ne.s32.totalorder %s117, %s118
      %p130 = scmp.eq.s32.totalorder %s24, 1
      %p131 = por %p129, %p130
      %p133 = scmp.ne.s32.totalorder %s118, %s132
      %p134 = scmp.eq.s32.totalorder %s24, 0
      %p135 = por %p133, %p134
      %s136 = ssub.s32 %s18, %s25
      %p137 = scmp.eq.s32.totalorder %s136, 0
      %s139 = sadd.s32 %s138, 1
      %s140 = scalar_select %p137, %s138, %s139
      %p143 = pneg %p137
      %p144 = scmp.eq.s32.totalorder %s18, 1
      %p145 = por %p143, %p144
      %p146 = scmp.ne.s32.totalorder %s138, %s141
      %p147 = scmp.eq.s32.totalorder %s18, 0
      %p148 = por %p146, %p147
      %p149 = scmp.ne.s32.totalorder %s138, %s141
      %p150 = scmp.eq.s32.totalorder %s23, 1
      %p151 = por %p149, %p150
      %p152 = scmp.ne.s32.totalorder %s141, %s142
      %p153 = scmp.eq.s32.totalorder %s23, 0
      %p154 = por %p152, %p153
      %p155 = scmp.ne.s32.totalorder %s141, %s142
      %p156 = scmp.eq.s32.totalorder %s24, 1
      %p157 = por %p155, %p156
      %p159 = scmp.ne.s32.totalorder %s142, %s158
      %p160 = scmp.eq.s32.totalorder %s24, 0
      %p161 = por %p159, %p160
      %p162 = scmp.le.s32.totalorder 1, %s18
      %p163 = scmp.lt.s32.totalorder %s18, 3
      %p164 = pnand %p162, %p163
      %p165 = pneg %p164
      // Predicated region
      $region9: #{tpu_custom_call.1} parent=5 // pred_check
        _
      $region10: #{tpu_custom_call.1} parent=5 // pred_check_branch
        %167 = sbr.rel (%p164) target = $region12
      $region11: #{tpu_custom_call.1} parent=5 // pred_region
        %s168 = ssub.s32 %s18, 1
        // Predicated region
        $region13: #{tpu_custom_call.1} parent=11 // pred_check
          %p169 = pneg %p65
        $region14: #{tpu_custom_call.1} parent=11 // pred_check_branch
          %171 = sbr.rel (%p169) target = $region16
        $region15: #{tpu_custom_call.1} parent=11 // pred_region
          %s173 = ssub.s32 4096, 4096
          %174 = vsyncadd [#allocation6], %s173
          %s175 = sshll.u32 [#allocation5], 4
          %s176 = int_to_ptr.vmem [resolvable:$true] %s175
          %181 = dma.hbm_to_vmem [thread:$0]  %s1, 4096, %s176, [#allocation6], 256, 256, 16
        $region16: #{tpu_custom_call.1} parent=11 // pred_fallthru
          _
        // Predicated region
        $region17: #{tpu_custom_call.1} parent=11 // pred_check
          %p182 = pneg %p86
        $region18: #{tpu_custom_call.1} parent=11 // pred_check_branch
          %184 = sbr.rel (%p182) target = $region20
        $region19: #{tpu_custom_call.1} parent=11 // pred_region
          _
        $region20: #{tpu_custom_call.1} parent=11 // pred_fallthru
          _
        // Predicated region
        $region21: #{tpu_custom_call.1} parent=11 // pred_check
          %p185 = pneg %p107
        $region22: #{tpu_custom_call.1} parent=11 // pred_check_branch
          %187 = sbr.rel (%p185) target = $region24
        $region23: #{tpu_custom_call.1} parent=11 // pred_region
          %s189 = ssub.s32 4096, 4096
          %190 = vsyncadd [#allocation6], %s189
          %s191 = sshll.u32 [#allocation7], 4
          %s192 = int_to_ptr.vmem [resolvable:$true] %s191
          %197 = dma.hbm_to_vmem [thread:$0]  %s3, 4096, %s192, [#allocation6], 64, 64, 4
        $region24: #{tpu_custom_call.1} parent=11 // pred_fallthru
          _
        // Predicated region
        $region25: #{tpu_custom_call.1} parent=11 // pred_check
          %p198 = pneg %p128
        $region26: #{tpu_custom_call.1} parent=11 // pred_check_branch
          %200 = sbr.rel (%p198) target = $region28
        $region27: #{tpu_custom_call.1} parent=11 // pred_region
          _
        $region28: #{tpu_custom_call.1} parent=11 // pred_fallthru
          _
      $region12: #{tpu_custom_call.1} parent=5 // pred_fallthru
        _
      %p201 = scmp.lt.s32.totalorder %s18, 2
      // Predicated region
      $region29: #{tpu_custom_call.1} parent=5 // pred_check
        %p202 = pneg %p201
      $region30: #{tpu_custom_call.1} parent=5 // pred_check_branch
        %204 = sbr.rel (%p202) target = $region32
      $region31: #{tpu_custom_call.1} parent=5 // pred_region
        // Predicated region
        $region33: #{tpu_custom_call.1} parent=31 // pred_check
          %p205 = pneg %p38
        $region34: #{tpu_custom_call.1} parent=31 // pred_check_branch
          %207 = sbr.rel (%p205) target = $region36
        $region35: #{tpu_custom_call.1} parent=31 // pred_region
          %s208 = sand.u32 %s28, 1
          %s209 = scalar_lea.sflag [#allocation3], %s208
          %s210 = sand.u32 %s28, 1
          %s211 = smul.addr %s210, 256
          %s212 = scalar_lea.vmem [#allocation2], %s211
          %s213 = smul.u32 32, %s18
          %s215 = ssub.s32 4096, 4096
          %216 = vsyncadd %s209, %s215
          %s217 = smul.addr %s213, 128
          %s218 = scalar_lea.hbm %s0, %s217
          %s219 = sshll.u32 %s212, 4
          %s220 = int_to_ptr.vmem [resolvable:$true] %s219
          %225 = dma.hbm_to_vmem [thread:$0]  %s218, 4096, %s220, %s209, 128, 128, 8
        $region36: #{tpu_custom_call.1} parent=31 // pred_fallthru
          _
      $region32: #{tpu_custom_call.1} parent=5 // pred_fallthru
        _
      %p226 = scmp.le.s32.totalorder 1, %s18
      %p227 = scmp.lt.s32.totalorder %s18, 3
      %p228 = pnand %p226, %p227
      %p229 = pneg %p228
      // Predicated region
      $region37: #{tpu_custom_call.1} parent=5 // pred_check
        _
      $region38: #{tpu_custom_call.1} parent=5 // pred_check_branch
        %231 = sbr.rel (%p228) target = $region40
      $region39: #{tpu_custom_call.1} parent=5 // pred_region
        %s232 = ssub.s32 %s18, 1
        %s233 = sand.u32 %s31, 1
        %s234 = scalar_lea.sflag [#allocation3], %s233
        %s235 = sand.u32 %s31, 1
        %s236 = smul.addr %s235, 256
        %s237 = scalar_lea.vmem [#allocation2], %s236
        // Predicated region
        $region41: #{tpu_custom_call.1} parent=39 // pred_check
          %p238 = pneg %p44
        $region42: #{tpu_custom_call.1} parent=39 // pred_check_branch
          %240 = sbr.rel (%p238) target = $region44
        $region43: #{tpu_custom_call.1} parent=39 // pred_region
          %241 = dma.done %s234, 4096
        $region44: #{tpu_custom_call.1} parent=39 // pred_fallthru
          _
        // Predicated region
        $region45: #{tpu_custom_call.1} parent=39 // pred_check
          %p242 = pneg %p65
        $region46: #{tpu_custom_call.1} parent=39 // pred_check_branch
          %244 = sbr.rel (%p242) target = $region48
        $region47: #{tpu_custom_call.1} parent=39 // pred_region
          %245 = dma.done [#allocation6], 4096
        $region48: #{tpu_custom_call.1} parent=39 // pred_fallthru
          _
        // Predicated region
        $region49: #{tpu_custom_call.1} parent=39 // pred_check
          %p246 = pneg %p107
        $region50: #{tpu_custom_call.1} parent=39 // pred_check_branch
          %248 = sbr.rel (%p246) target = $region52
        $region51: #{tpu_custom_call.1} parent=39 // pred_region
          %249 = dma.done [#allocation6], 4096
        $region52: #{tpu_custom_call.1} parent=39 // pred_fallthru
          _
        %s250 = sand.u32 %s31, 1
        %s251 = scalar_lea.sflag [#allocation3], %s250
        %s252 = sand.u32 %s31, 1
        %s253 = smul.addr %s252, 256
        %s254 = scalar_lea.vmem [#allocation2], %s253
        %p255 = pneg %p44
        %p256 = pneg %p41
        %p257 = pneg %p65
        %p258 = pneg %p62
        %p259 = pneg %p86
        %p260 = pneg %p83
        %p261 = pneg %p107
        %p262 = pneg %p104
        %p263 = pneg %p128
        %p264 = pneg %p125
        %p265 = pneg %p154
        %p266 = pneg %p151
        %s267 = sand.u32 %s141, 1
        %s268 = scalar_lea.sflag [#allocation4], %s267
        %s269 = sand.u32 %s141, 1
        %s270 = smul.addr %s269, 256
        %s271 = scalar_lea.vmem [#allocation8], %s270
        %s272 = smul.u32 32, %s23
        %s273 = smul.u32 32, %s23
        %v275 = vld [vmem:[%s237] sm:$0xff]
        %v276 = vld [vmem:[%s237 + $0x8] sm:$0xff]
        %v277 = vld [vmem:[%s237 + $0x10] sm:$0xff]
        %v278 = vld [vmem:[%s237 + $0x18] sm:$0xff]
        %v279 = vld [vmem:[%s237 + $0x20] sm:$0xff]
        %v280 = vld [vmem:[%s237 + $0x28] sm:$0xff]
        %v281 = vld [vmem:[%s237 + $0x30] sm:$0xff]
        %v282 = vld [vmem:[%s237 + $0x38] sm:$0xff]
        %v283 = vld [vmem:[%s237 + $0x40] sm:$0xff]
        %v284 = vld [vmem:[%s237 + $0x48] sm:$0xff]
        %v285 = vld [vmem:[%s237 + $0x50] sm:$0xff]
        %v286 = vld [vmem:[%s237 + $0x58] sm:$0xff]
        %v287 = vld [vmem:[%s237 + $0x60] sm:$0xff]
        %v288 = vld [vmem:[%s237 + $0x68] sm:$0xff]
        %v289 = vld [vmem:[%s237 + $0x70] sm:$0xff]
        %v290 = vld [vmem:[%s237 + $0x78] sm:$0xff]
        %v291 = vld [vmem:[%s237 + $0x80] sm:$0xff]
        %v292 = vld [vmem:[%s237 + $0x88] sm:$0xff]
        %v293 = vld [vmem:[%s237 + $0x90] sm:$0xff]
        %v294 = vld [vmem:[%s237 + $0x98] sm:$0xff]
        %v295 = vld [vmem:[%s237 + $0xa0] sm:$0xff]
        %v296 = vld [vmem:[%s237 + $0xa8] sm:$0xff]
        %v297 = vld [vmem:[%s237 + $0xb0] sm:$0xff]
        %v298 = vld [vmem:[%s237 + $0xb8] sm:$0xff]
        %v299 = vld [vmem:[%s237 + $0xc0] sm:$0xff]
        %v300 = vld [vmem:[%s237 + $0xc8] sm:$0xff]
        %v301 = vld [vmem:[%s237 + $0xd0] sm:$0xff]
        %v302 = vld [vmem:[%s237 + $0xd8] sm:$0xff]
        %v303 = vld [vmem:[%s237 + $0xe0] sm:$0xff]
        %v304 = vld [vmem:[%s237 + $0xe8] sm:$0xff]
        %v305 = vld [vmem:[%s237 + $0xf0] sm:$0xff]
        %v306 = vld [vmem:[%s237 + $0xf8] sm:$0xff]
        %v307 = vpack.c.bf16 %v276, %v275
        %v308 = vpack.c.bf16 %v278, %v277
        %v309 = vpack.c.bf16 %v280, %v279
        %v310 = vpack.c.bf16 %v282, %v281
        %v311 = vpack.c.bf16 %v284, %v283
        %v312 = vpack.c.bf16 %v286, %v285
        %v313 = vpack.c.bf16 %v288, %v287
        %v314 = vpack.c.bf16 %v290, %v289
        %v315 = vpack.c.bf16 %v292, %v291
        %v316 = vpack.c.bf16 %v294, %v293
        %v317 = vpack.c.bf16 %v296, %v295
        %v318 = vpack.c.bf16 %v298, %v297
        %v319 = vpack.c.bf16 %v300, %v299
        %v320 = vpack.c.bf16 %v302, %v301
        %v321 = vpack.c.bf16 %v304, %v303
        %v322 = vpack.c.bf16 %v306, %v305
        %v323 = vld [vmem:[#allocation5] sm:$0xff]
        %v324 = vld [vmem:[#allocation5 + $0x8] sm:$0xff]
        %v325 = vld [vmem:[#allocation5 + $0x10] sm:$0xff]
        %v326 = vld [vmem:[#allocation5 + $0x18] sm:$0xff]
        %v327 = vld [vmem:[#allocation5 + $0x20] sm:$0xff]
        %v328 = vld [vmem:[#allocation5 + $0x28] sm:$0xff]
        %v329 = vld [vmem:[#allocation5 + $0x30] sm:$0xff]
        %v330 = vld [vmem:[#allocation5 + $0x38] sm:$0xff]
        %v331 = vld [vmem:[#allocation5 + $0x40] sm:$0xff]
        %v332 = vld [vmem:[#allocation5 + $0x48] sm:$0xff]
        %v333 = vld [vmem:[#allocation5 + $0x50] sm:$0xff]
        %v334 = vld [vmem:[#allocation5 + $0x58] sm:$0xff]
        %v335 = vld [vmem:[#allocation5 + $0x60] sm:$0xff]
        %v336 = vld [vmem:[#allocation5 + $0x68] sm:$0xff]
        %v337 = vld [vmem:[#allocation5 + $0x70] sm:$0xff]
        %v338 = vld [vmem:[#allocation5 + $0x78] sm:$0xff]
        %v339 = vld [vmem:[#allocation5 + $0x80] sm:$0xff]
        %v340 = vld [vmem:[#allocation5 + $0x88] sm:$0xff]
        %v341 = vld [vmem:[#allocation5 + $0x90] sm:$0xff]
        %v342 = vld [vmem:[#allocation5 + $0x98] sm:$0xff]
        %v343 = vld [vmem:[#allocation5 + $0xa0] sm:$0xff]
        %v344 = vld [vmem:[#allocation5 + $0xa8] sm:$0xff]
        %v345 = vld [vmem:[#allocation5 + $0xb0] sm:$0xff]
        %v346 = vld [vmem:[#allocation5 + $0xb8] sm:$0xff]
        %v347 = vld [vmem:[#allocation5 + $0xc0] sm:$0xff]
        %v348 = vld [vmem:[#allocation5 + $0xc8] sm:$0xff]
        %v349 = vld [vmem:[#allocation5 + $0xd0] sm:$0xff]
        %v350 = vld [vmem:[#allocation5 + $0xd8] sm:$0xff]
        %v351 = vld [vmem:[#allocation5 + $0xe0] sm:$0xff]
        %v352 = vld [vmem:[#allocation5 + $0xe8] sm:$0xff]
        %v353 = vld [vmem:[#allocation5 + $0xf0] sm:$0xff]
        %v354 = vld [vmem:[#allocation5 + $0xf8] sm:$0xff]
        %v355 = vld [vmem:[%s2] sm:$0xf]
        %v357 = vlaneseq
        %v358 = vshrl.u32 %v357, 7
        %v359 = vsub.s32 0, %v358
        %v360 = vrot.slane %v355, %v359
        %v361 = vlaneseq
        %v362 = vshrl.u32 %v361, 7
        %v363 = vsub.s32 1, %v362
        %v364 = vrot.slane %v355, %v363
        %v365 = vlaneseq
        %v366 = vshrl.u32 %v365, 7
        %v367 = vsub.s32 2, %v366
        %v368 = vrot.slane %v355, %v367
        %v369 = vlaneseq
        %v370 = vshrl.u32 %v369, 7
        %v371 = vsub.s32 3, %v370
        %v372 = vrot.slane %v355, %v371
        %v409 = vunpack.c.l.b16 %v323
        %v410 = vunpack.c.h.b16 %v323
        %v411 = vunpack.c.l.b16 %v324
        %v412 = vunpack.c.h.b16 %v324
        %v413 = vunpack.c.l.b16 %v325
        %v414 = vunpack.c.h.b16 %v325
        %v415 = vunpack.c.l.b16 %v326
        %v416 = vunpack.c.h.b16 %v326
        %v417 = vunpack.c.l.b16 %v327
        %v418 = vunpack.c.h.b16 %v327
        %v419 = vunpack.c.l.b16 %v328
        %v420 = vunpack.c.h.b16 %v328
        %v421 = vunpack.c.l.b16 %v329
        %v422 = vunpack.c.h.b16 %v329
        %v423 = vunpack.c.l.b16 %v330
        %v424 = vunpack.c.h.b16 %v330
        %v425 = vunpack.c.l.b16 %v331
        %v426 = vunpack.c.h.b16 %v331
        %v427 = vunpack.c.l.b16 %v332
        %v428 = vunpack.c.h.b16 %v332
        %v429 = vunpack.c.l.b16 %v333
        %v430 = vunpack.c.h.b16 %v333
        %v431 = vunpack.c.l.b16 %v334
        %v432 = vunpack.c.h.b16 %v334
        %v433 = vunpack.c.l.b16 %v335
        %v434 = vunpack.c.h.b16 %v335
        %v435 = vunpack.c.l.b16 %v336
        %v436 = vunpack.c.h.b16 %v336
        %v437 = vunpack.c.l.b16 %v337
        %v438 = vunpack.c.h.b16 %v337
        %v439 = vunpack.c.l.b16 %v338
        %v440 = vunpack.c.h.b16 %v338
        %v441 = vunpack.c.l.b16 %v339
        %v442 = vunpack.c.h.b16 %v339
        %v443 = vunpack.c.l.b16 %v340
        %v444 = vunpack.c.h.b16 %v340
        %v445 = vunpack.c.l.b16 %v341
        %v446 = vunpack.c.h.b16 %v341
        %v447 = vunpack.c.l.b16 %v342
        %v448 = vunpack.c.h.b16 %v342
        %v449 = vunpack.c.l.b16 %v343
        %v450 = vunpack.c.h.b16 %v343
        %v451 = vunpack.c.l.b16 %v344
        %v452 = vunpack.c.h.b16 %v344
        %v453 = vunpack.c.l.b16 %v345
        %v454 = vunpack.c.h.b16 %v345
        %v455 = vunpack.c.l.b16 %v346
        %v456 = vunpack.c.h.b16 %v346
        %v457 = vunpack.c.l.b16 %v347
        %v458 = vunpack.c.h.b16 %v347
        %v459 = vunpack.c.l.b16 %v348
        %v460 = vunpack.c.h.b16 %v348
        %v461 = vunpack.c.l.b16 %v349
        %v462 = vunpack.c.h.b16 %v349
        %v463 = vunpack.c.l.b16 %v350
        %v464 = vunpack.c.h.b16 %v350
        %v465 = vunpack.c.l.b16 %v351
        %v466 = vunpack.c.h.b16 %v351
        %v467 = vunpack.c.l.b16 %v352
        %v468 = vunpack.c.h.b16 %v352
        %v469 = vunpack.c.l.b16 %v353
        %v470 = vunpack.c.h.b16 %v353
        %v471 = vunpack.c.l.b16 %v354
        %v472 = vunpack.c.h.b16 %v354
        %v473 = vpack.c.b16 %v413, %v409
        %v474 = vpack.c.b16 %v414, %v410
        %v475 = vpack.c.b16 %v415, %v411
        %v476 = vpack.c.b16 %v416, %v412
        %v477 = vpack.c.b16 %v421, %v417
        %v478 = vpack.c.b16 %v422, %v418
        %v479 = vpack.c.b16 %v423, %v419
        %v480 = vpack.c.b16 %v424, %v420
        %v481 = vpack.c.b16 %v429, %v425
        %v482 = vpack.c.b16 %v430, %v426
        %v483 = vpack.c.b16 %v431, %v427
        %v484 = vpack.c.b16 %v432, %v428
        %v485 = vpack.c.b16 %v437, %v433
        %v486 = vpack.c.b16 %v438, %v434
        %v487 = vpack.c.b16 %v439, %v435
        %v488 = vpack.c.b16 %v440, %v436
        %v489 = vpack.c.b16 %v445, %v441
        %v490 = vpack.c.b16 %v446, %v442
        %v491 = vpack.c.b16 %v447, %v443
        %v492 = vpack.c.b16 %v448, %v444
        %v493 = vpack.c.b16 %v453, %v449
        %v494 = vpack.c.b16 %v454, %v450
        %v495 = vpack.c.b16 %v455, %v451
        %v496 = vpack.c.b16 %v456, %v452
        %v497 = vpack.c.b16 %v461, %v457
        %v498 = vpack.c.b16 %v462, %v458
        %v499 = vpack.c.b16 %v463, %v459
        %v500 = vpack.c.b16 %v464, %v460
        %v501 = vpack.c.b16 %v469, %v465
        %v502 = vpack.c.b16 %v470, %v466
        %v503 = vpack.c.b16 %v471, %v467
        %v504 = vpack.c.b16 %v472, %v468
        %537 = vmatprep.subr.bf16.mxu0 %v474
        %538 = vmatpush1.bf16.msra.mxu0 %v473
        %539 = vmatprep.subr.bf16.mxu0 %v478
        %540 = vmatpush1.bf16.msra.mxu0 %v477
        %541 = vmatprep.subr.bf16.mxu0 %v482
        %542 = vmatpush1.bf16.msra.mxu0 %v481
        %543 = vmatprep.subr.bf16.mxu0 %v486
        %544 = vmatpush1.bf16.msra.mxu0 %v485
        %545 = vmatprep.subr.bf16.mxu0 %v490
        %546 = vmatpush1.bf16.msra.mxu0 %v489
        %547 = vmatprep.subr.bf16.mxu0 %v494
        %548 = vmatpush1.bf16.msra.mxu0 %v493
        %549 = vmatprep.subr.bf16.mxu0 %v498
        %550 = vmatpush1.bf16.msra.mxu0 %v497
        %551 = vmatprep.subr.bf16.mxu0 %v502
        %552 = vmatpush1.bf16.msra.mxu0 %v501
        %553 = vmatprep.subr.bf16.mxu0 0
        %554 = vmatpush1.bf16.msra.mxu0 0
        %555 = vmatprep.subr.bf16.mxu0 0
        %556 = vmatpush1.bf16.msra.mxu0 0
        %557 = vmatprep.subr.bf16.mxu0 0
        %558 = vmatpush1.bf16.msra.mxu0 0
        %559 = vmatprep.subr.bf16.mxu0 0
        %560 = vmatpush1.bf16.msra.mxu0 0
        %561 = vmatprep.subr.bf16.mxu0 0
        %562 = vmatpush1.bf16.msra.mxu0 0
        %563 = vmatprep.subr.bf16.mxu0 0
        %564 = vmatpush1.bf16.msra.mxu0 0
        %565 = vmatprep.subr.bf16.mxu0 0
        %566 = vmatpush1.bf16.msra.mxu0 0
        %567 = vmatprep.subr.bf16.mxu0 0
        %568 = vmatpush1.bf16.msra.mxu0 0
        %569 = vmatprep.mubr.bf16.mxu0 0
        %570 = vmatmul.mubr.bf16.gmra.mrb[0].mxu0 %v307
        %v571 = vpop.f32.mrb[0].mxu0
        %v572 = vadd.f32 %v360, %v571
        %v573 = vpop.f32.mrb[0].mxu0
        %v574 = vadd.f32 %v364, %v573
        %v575 = vpop.f32.mrb[0].mxu0
        %v576 = vadd.f32 %v360, %v575
        %v577 = vpop.f32.mrb[0].mxu0
        %v578 = vadd.f32 %v364, %v577
        %579 = vmatprep.mubr.bf16.mxu0 0
        %580 = vmatmul.mubr.bf16.gmra.mrb[0].mxu0 %v308
        %v581 = vpop.f32.mrb[0].mxu0
        %v582 = vadd.f32 %v360, %v581
        %v583 = vpop.f32.mrb[0].mxu0
        %v584 = vadd.f32 %v364, %v583
        %v585 = vpop.f32.mrb[0].mxu0
        %v586 = vadd.f32 %v360, %v585
        %v587 = vpop.f32.mrb[0].mxu0
        %v588 = vadd.f32 %v364, %v587
        %589 = vmatprep.mubr.bf16.mxu0 0
        %590 = vmatmul.mubr.bf16.gmra.mrb[0].mxu0 %v309
        %v591 = vpop.f32.mrb[0].mxu0
        %v592 = vadd.f32 %v360, %v591
        %v593 = vpop.f32.mrb[0].mxu0
        %v594 = vadd.f32 %v364, %v593
        %v595 = vpop.f32.mrb[0].mxu0
        %v596 = vadd.f32 %v360, %v595
        %v597 = vpop.f32.mrb[0].mxu0
        %v598 = vadd.f32 %v364, %v597
        %599 = vmatprep.mubr.bf16.mxu0 0
        %600 = vmatmul.mubr.bf16.gmra.mrb[0].mxu0 %v310
        %v601 = vpop.f32.mrb[0].mxu0
        %v602 = vadd.f32 %v360, %v601
        %v603 = vpop.f32.mrb[0].mxu0
        %v604 = vadd.f32 %v364, %v603
        %v605 = vpop.f32.mrb[0].mxu0
        %v606 = vadd.f32 %v360, %v605
        %v607 = vpop.f32.mrb[0].mxu0
        %v608 = vadd.f32 %v364, %v607
        %609 = vmatprep.mubr.bf16.mxu0 0
        %610 = vmatmul.mubr.bf16.gmra.mrb[0].mxu0 %v311
        %v611 = vpop.f32.mrb[0].mxu0
        %v612 = vadd.f32 %v360, %v611
        %v613 = vpop.f32.mrb[0].mxu0
        %v614 = vadd.f32 %v364, %v613
        %v615 = vpop.f32.mrb[0].mxu0
        %v616 = vadd.f32 %v360, %v615
        %v617 = vpop.f32.mrb[0].mxu0
        %v618 = vadd.f32 %v364, %v617
        %619 = vmatprep.mubr.bf16.mxu0 0
        %620 = vmatmul.mubr.bf16.gmra.mrb[0].mxu0 %v312
        %v621 = vpop.f32.mrb[0].mxu0
        %v622 = vadd.f32 %v360, %v621
        %v623 = vpop.f32.mrb[0].mxu0
        %v624 = vadd.f32 %v364, %v623
        %v625 = vpop.f32.mrb[0].mxu0
        %v626 = vadd.f32 %v360, %v625
        %v627 = vpop.f32.mrb[0].mxu0
        %v628 = vadd.f32 %v364, %v627
        %629 = vmatprep.mubr.bf16.mxu0 0
        %630 = vmatmul.mubr.bf16.gmra.mrb[0].mxu0 %v313
        %v631 = vpop.f32.mrb[0].mxu0
        %v632 = vadd.f32 %v360, %v631
        %v633 = vpop.f32.mrb[0].mxu0
        %v634 = vadd.f32 %v364, %v633
        %v635 = vpop.f32.mrb[0].mxu0
        %v636 = vadd.f32 %v360, %v635
        %v637 = vpop.f32.mrb[0].mxu0
        %v638 = vadd.f32 %v364, %v637
        %639 = vmatprep.mubr.bf16.mxu0 0
        %640 = vmatmul.mubr.bf16.gmra.mrb[0].mxu0 %v314
        %v641 = vpop.f32.mrb[0].mxu0
        %v642 = vadd.f32 %v360, %v641
        %v643 = vpop.f32.mrb[0].mxu0
        %v644 = vadd.f32 %v364, %v643
        %v645 = vpop.f32.mrb[0].mxu0
        %v646 = vadd.f32 %v360, %v645
        %v647 = vpop.f32.mrb[0].mxu0
        %v648 = vadd.f32 %v364, %v647
        %649 = vmatprep.mubr.bf16.mxu0 0
        %650 = vmatmul.mubr.bf16.gmra.mrb[0].mxu0 %v315
        %v651 = vpop.f32.mrb[0].mxu0
        %v652 = vadd.f32 %v360, %v651
        %v653 = vpop.f32.mrb[0].mxu0
        %v654 = vadd.f32 %v364, %v653
        %v655 = vpop.f32.mrb[0].mxu0
        %v656 = vadd.f32 %v360, %v655
        %v657 = vpop.f32.mrb[0].mxu0
        %v658 = vadd.f32 %v364, %v657
        %659 = vmatprep.mubr.bf16.mxu0 0
        %660 = vmatmul.mubr.bf16.gmra.mrb[0].mxu0 %v316
        %v661 = vpop.f32.mrb[0].mxu0
        %v662 = vadd.f32 %v360, %v661
        %v663 = vpop.f32.mrb[0].mxu0
        %v664 = vadd.f32 %v364, %v663
        %v665 = vpop.f32.mrb[0].mxu0
        %v666 = vadd.f32 %v360, %v665
        %v667 = vpop.f32.mrb[0].mxu0
        %v668 = vadd.f32 %v364, %v667
        %669 = vmatprep.mubr.bf16.mxu0 0
        %670 = vmatmul.mubr.bf16.gmra.mrb[0].mxu0 %v317
        %v671 = vpop.f32.mrb[0].mxu0
        %v672 = vadd.f32 %v360, %v671
        %v673 = vpop.f32.mrb[0].mxu0
        %v674 = vadd.f32 %v364, %v673
        %v675 = vpop.f32.mrb[0].mxu0
        %v676 = vadd.f32 %v360, %v675
        %v677 = vpop.f32.mrb[0].mxu0
        %v678 = vadd.f32 %v364, %v677
        %679 = vmatprep.mubr.bf16.mxu0 0
        %680 = vmatmul.mubr.bf16.gmra.mrb[0].mxu0 %v318
        %v681 = vpop.f32.mrb[0].mxu0
        %v682 = vadd.f32 %v360, %v681
        %v683 = vpop.f32.mrb[0].mxu0
        %v684 = vadd.f32 %v364, %v683
        %v685 = vpop.f32.mrb[0].mxu0
        %v686 = vadd.f32 %v360, %v685
        %v687 = vpop.f32.mrb[0].mxu0
        %v688 = vadd.f32 %v364, %v687
        %689 = vmatprep.mubr.bf16.mxu0 0
        %690 = vmatmul.mubr.bf16.gmra.mrb[0].mxu0 %v319
        %v691 = vpop.f32.mrb[0].mxu0
        %v692 = vadd.f32 %v360, %v691
        %v693 = vpop.f32.mrb[0].mxu0
        %v694 = vadd.f32 %v364, %v693
        %v695 = vpop.f32.mrb[0].mxu0
        %v696 = vadd.f32 %v360, %v695
        %v697 = vpop.f32.mrb[0].mxu0
        %v698 = vadd.f32 %v364, %v697
        %699 = vmatprep.mubr.bf16.mxu0 0
        %700 = vmatmul.mubr.bf16.gmra.mrb[0].mxu0 %v320
        %v701 = vpop.f32.mrb[0].mxu0
        %v702 = vadd.f32 %v360, %v701
        %v703 = vpop.f32.mrb[0].mxu0
        %v704 = vadd.f32 %v364, %v703
        %v705 = vpop.f32.mrb[0].mxu0
        %v706 = vadd.f32 %v360, %v705
        %v707 = vpop.f32.mrb[0].mxu0
        %v708 = vadd.f32 %v364, %v707
        %709 = vmatprep.mubr.bf16.mxu0 0
        %710 = vmatmul.mubr.bf16.gmra.mrb[0].mxu0 %v321
        %v711 = vpop.f32.mrb[0].mxu0
        %v712 = vadd.f32 %v360, %v711
        %v713 = vpop.f32.mrb[0].mxu0
        %v714 = vadd.f32 %v364, %v713
        %v715 = vpop.f32.mrb[0].mxu0
        %v716 = vadd.f32 %v360, %v715
        %v717 = vpop.f32.mrb[0].mxu0
        %v718 = vadd.f32 %v364, %v717
        %719 = vmatprep.mubr.bf16.mxu0 0
        %720 = vmatmul.mubr.bf16.gmra.mrb[0].mxu0 %v322
        %v721 = vpop.f32.mrb[0].mxu0
        %v722 = vadd.f32 %v360, %v721
        %v723 = vpop.f32.mrb[0].mxu0
        %v724 = vadd.f32 %v364, %v723
        %v725 = vpop.f32.mrb[0].mxu0
        %v726 = vadd.f32 %v360, %v725
        %v727 = vpop.f32.mrb[0].mxu0
        %v728 = vadd.f32 %v364, %v727
        %729 = vdwg.mxu0
        %730 = vmatprep.subr.bf16.mxu0 %v476
        %731 = vmatpush1.bf16.msra.mxu0 %v475
        %732 = vmatprep.subr.bf16.mxu0 %v480
        %733 = vmatpush1.bf16.msra.mxu0 %v479
        %734 = vmatprep.subr.bf16.mxu0 %v484
        %735 = vmatpush1.bf16.msra.mxu0 %v483
        %736 = vmatprep.subr.bf16.mxu0 %v488
        %737 = vmatpush1.bf16.msra.mxu0 %v487
        %738 = vmatprep.subr.bf16.mxu0 %v492
        %739 = vmatpush1.bf16.msra.mxu0 %v491
        %740 = vmatprep.subr.bf16.mxu0 %v496
        %741 = vmatpush1.bf16.msra.mxu0 %v495
        %742 = vmatprep.subr.bf16.mxu0 %v500
        %743 = vmatpush1.bf16.msra.mxu0 %v499
        %744 = vmatprep.subr.bf16.mxu0 %v504
        %745 = vmatpush1.bf16.msra.mxu0 %v503
        %746 = vmatprep.subr.bf16.mxu0 0
        %747 = vmatpush1.bf16.msra.mxu0 0
        %748 = vmatprep.subr.bf16.mxu0 0
        %749 = vmatpush1.bf16.msra.mxu0 0
        %750 = vmatprep.subr.bf16.mxu0 0
        %751 = vmatpush1.bf16.msra.mxu0 0
        %752 = vmatprep.subr.bf16.mxu0 0
        %753 = vmatpush1.bf16.msra.mxu0 0
        %754 = vmatprep.subr.bf16.mxu0 0
        %755 = vmatpush1.bf16.msra.mxu0 0
        %756 = vmatprep.subr.bf16.mxu0 0
        %757 = vmatpush1.bf16.msra.mxu0 0
        %758 = vmatprep.subr.bf16.mxu0 0
        %759 = vmatpush1.bf16.msra.mxu0 0
        %760 = vmatprep.subr.bf16.mxu0 0
        %761 = vmatpush1.bf16.msra.mxu0 0
        %762 = vmatprep.mubr.bf16.mxu0 0
        %763 = vmatmul.mubr.bf16.gmra.mrb[0].mxu0 %v307
        %v764 = vpop.f32.mrb[0].mxu0
        %v765 = vadd.f32 %v368, %v764
        %v766 = vpop.f32.mrb[0].mxu0
        %v767 = vadd.f32 %v372, %v766
        %v768 = vpop.f32.mrb[0].mxu0
        %v769 = vadd.f32 %v368, %v768
        %v770 = vpop.f32.mrb[0].mxu0
        %v771 = vadd.f32 %v372, %v770
        %772 = vmatprep.mubr.bf16.mxu0 0
        %773 = vmatmul.mubr.bf16.gmra.mrb[0].mxu0 %v308
        %v774 = vpop.f32.mrb[0].mxu0
        %v775 = vadd.f32 %v368, %v774
        %v776 = vpop.f32.mrb[0].mxu0
        %v777 = vadd.f32 %v372, %v776
        %v778 = vpop.f32.mrb[0].mxu0
        %v779 = vadd.f32 %v368, %v778
        %v780 = vpop.f32.mrb[0].mxu0
        %v781 = vadd.f32 %v372, %v780
        %782 = vmatprep.mubr.bf16.mxu0 0
        %783 = vmatmul.mubr.bf16.gmra.mrb[0].mxu0 %v309
        %v784 = vpop.f32.mrb[0].mxu0
        %v785 = vadd.f32 %v368, %v784
        %v786 = vpop.f32.mrb[0].mxu0
        %v787 = vadd.f32 %v372, %v786
        %v788 = vpop.f32.mrb[0].mxu0
        %v789 = vadd.f32 %v368, %v788
        %v790 = vpop.f32.mrb[0].mxu0
        %v791 = vadd.f32 %v372, %v790
        %792 = vmatprep.mubr.bf16.mxu0 0
        %793 = vmatmul.mubr.bf16.gmra.mrb[0].mxu0 %v310
        %v794 = vpop.f32.mrb[0].mxu0
        %v795 = vadd.f32 %v368, %v794
        %v796 = vpop.f32.mrb[0].mxu0
        %v797 = vadd.f32 %v372, %v796
        %v798 = vpop.f32.mrb[0].mxu0
        %v799 = vadd.f32 %v368, %v798
        %v800 = vpop.f32.mrb[0].mxu0
        %v801 = vadd.f32 %v372, %v800
        %802 = vmatprep.mubr.bf16.mxu0 0
        %803 = vmatmul.mubr.bf16.gmra.mrb[0].mxu0 %v311
        %v804 = vpop.f32.mrb[0].mxu0
        %v805 = vadd.f32 %v368, %v804
        %v806 = vpop.f32.mrb[0].mxu0
        %v807 = vadd.f32 %v372, %v806
        %v808 = vpop.f32.mrb[0].mxu0
        %v809 = vadd.f32 %v368, %v808
        %v810 = vpop.f32.mrb[0].mxu0
        %v811 = vadd.f32 %v372, %v810
        %812 = vmatprep.mubr.bf16.mxu0 0
        %813 = vmatmul.mubr.bf16.gmra.mrb[0].mxu0 %v312
        %v814 = vpop.f32.mrb[0].mxu0
        %v815 = vadd.f32 %v368, %v814
        %v816 = vpop.f32.mrb[0].mxu0
        %v817 = vadd.f32 %v372, %v816
        %v818 = vpop.f32.mrb[0].mxu0
        %v819 = vadd.f32 %v368, %v818
        %v820 = vpop.f32.mrb[0].mxu0
        %v821 = vadd.f32 %v372, %v820
        %822 = vmatprep.mubr.bf16.mxu0 0
        %823 = vmatmul.mubr.bf16.gmra.mrb[0].mxu0 %v313
        %v824 = vpop.f32.mrb[0].mxu0
        %v825 = vadd.f32 %v368, %v824
        %v826 = vpop.f32.mrb[0].mxu0
        %v827 = vadd.f32 %v372, %v826
        %v828 = vpop.f32.mrb[0].mxu0
        %v829 = vadd.f32 %v368, %v828
        %v830 = vpop.f32.mrb[0].mxu0
        %v831 = vadd.f32 %v372, %v830
        %832 = vmatprep.mubr.bf16.mxu0 0
        %833 = vmatmul.mubr.bf16.gmra.mrb[0].mxu0 %v314
        %v834 = vpop.f32.mrb[0].mxu0
        %v835 = vadd.f32 %v368, %v834
        %v836 = vpop.f32.mrb[0].mxu0
        %v837 = vadd.f32 %v372, %v836
        %v838 = vpop.f32.mrb[0].mxu0
        %v839 = vadd.f32 %v368, %v838
        %v840 = vpop.f32.mrb[0].mxu0
        %v841 = vadd.f32 %v372, %v840
        %842 = vmatprep.mubr.bf16.mxu0 0
        %843 = vmatmul.mubr.bf16.gmra.mrb[0].mxu0 %v315
        %v844 = vpop.f32.mrb[0].mxu0
        %v845 = vadd.f32 %v368, %v844
        %v846 = vpop.f32.mrb[0].mxu0
        %v847 = vadd.f32 %v372, %v846
        %v848 = vpop.f32.mrb[0].mxu0
        %v849 = vadd.f32 %v368, %v848
        %v850 = vpop.f32.mrb[0].mxu0
        %v851 = vadd.f32 %v372, %v850
        %852 = vmatprep.mubr.bf16.mxu0 0
        %853 = vmatmul.mubr.bf16.gmra.mrb[0].mxu0 %v316
        %v854 = vpop.f32.mrb[0].mxu0
        %v855 = vadd.f32 %v368, %v854
        %v856 = vpop.f32.mrb[0].mxu0
        %v857 = vadd.f32 %v372, %v856
        %v858 = vpop.f32.mrb[0].mxu0
        %v859 = vadd.f32 %v368, %v858
        %v860 = vpop.f32.mrb[0].mxu0
        %v861 = vadd.f32 %v372, %v860
        %862 = vmatprep.mubr.bf16.mxu0 0
        %863 = vmatmul.mubr.bf16.gmra.mrb[0].mxu0 %v317
        %v864 = vpop.f32.mrb[0].mxu0
        %v865 = vadd.f32 %v368, %v864
        %v866 = vpop.f32.mrb[0].mxu0
        %v867 = vadd.f32 %v372, %v866
        %v868 = vpop.f32.mrb[0].mxu0
        %v869 = vadd.f32 %v368, %v868
        %v870 = vpop.f32.mrb[0].mxu0
        %v871 = vadd.f32 %v372, %v870
        %872 = vmatprep.mubr.bf16.mxu0 0
        %873 = vmatmul.mubr.bf16.gmra.mrb[0].mxu0 %v318
        %v874 = vpop.f32.mrb[0].mxu0
        %v875 = vadd.f32 %v368, %v874
        %v876 = vpop.f32.mrb[0].mxu0
        %v877 = vadd.f32 %v372, %v876
        %v878 = vpop.f32.mrb[0].mxu0
        %v879 = vadd.f32 %v368, %v878
        %v880 = vpop.f32.mrb[0].mxu0
        %v881 = vadd.f32 %v372, %v880
        %882 = vmatprep.mubr.bf16.mxu0 0
        %883 = vmatmul.mubr.bf16.gmra.mrb[0].mxu0 %v319
        %v884 = vpop.f32.mrb[0].mxu0
        %v885 = vadd.f32 %v368, %v884
        %v886 = vpop.f32.mrb[0].mxu0
        %v887 = vadd.f32 %v372, %v886
        %v888 = vpop.f32.mrb[0].mxu0
        %v889 = vadd.f32 %v368, %v888
        %v890 = vpop.f32.mrb[0].mxu0
        %v891 = vadd.f32 %v372, %v890
        %892 = vmatprep.mubr.bf16.mxu0 0
        %893 = vmatmul.mubr.bf16.gmra.mrb[0].mxu0 %v320
        %v894 = vpop.f32.mrb[0].mxu0
        %v895 = vadd.f32 %v368, %v894
        %v896 = vpop.f32.mrb[0].mxu0
        %v897 = vadd.f32 %v372, %v896
        %v898 = vpop.f32.mrb[0].mxu0
        %v899 = vadd.f32 %v368, %v898
        %v900 = vpop.f32.mrb[0].mxu0
        %v901 = vadd.f32 %v372, %v900
        %902 = vmatprep.mubr.bf16.mxu0 0
        %903 = vmatmul.mubr.bf16.gmra.mrb[0].mxu0 %v321
        %v904 = vpop.f32.mrb[0].mxu0
        %v905 = vadd.f32 %v368, %v904
        %v906 = vpop.f32.mrb[0].mxu0
        %v907 = vadd.f32 %v372, %v906
        %v908 = vpop.f32.mrb[0].mxu0
        %v909 = vadd.f32 %v368, %v908
        %v910 = vpop.f32.mrb[0].mxu0
        %v911 = vadd.f32 %v372, %v910
        %912 = vmatprep.mubr.bf16.mxu0 0
        %913 = vmatmul.mubr.bf16.gmra.mrb[0].mxu0 %v322
        %v914 = vpop.f32.mrb[0].mxu0
        %v915 = vadd.f32 %v368, %v914
        %v916 = vpop.f32.mrb[0].mxu0
        %v917 = vadd.f32 %v372, %v916
        %v918 = vpop.f32.mrb[0].mxu0
        %v919 = vadd.f32 %v368, %v918
        %v920 = vpop.f32.mrb[0].mxu0
        %v921 = vadd.f32 %v372, %v920
        %922 = vdwg.mxu0
        %v923 = vmul.f32 %v572, 0.5
        %v924 = vmul.f32 %v574, 0.5
        %v925 = vmul.f32 %v765, 0.5
        %v926 = vmul.f32 %v767, 0.5
        %v927 = vmul.f32 %v576, 0.5
        %v928 = vmul.f32 %v578, 0.5
        %v929 = vmul.f32 %v769, 0.5
        %v930 = vmul.f32 %v771, 0.5
        %v931 = vmul.f32 %v582, 0.5
        %v932 = vmul.f32 %v584, 0.5
        %v933 = vmul.f32 %v775, 0.5
        %v934 = vmul.f32 %v777, 0.5
        %v935 = vmul.f32 %v586, 0.5
        %v936 = vmul.f32 %v588, 0.5
        %v937 = vmul.f32 %v779, 0.5
        %v938 = vmul.f32 %v781, 0.5
        %v939 = vmul.f32 %v592, 0.5
        %v940 = vmul.f32 %v594, 0.5
        %v941 = vmul.f32 %v785, 0.5
        %v942 = vmul.f32 %v787, 0.5
        %v943 = vmul.f32 %v596, 0.5
        %v944 = vmul.f32 %v598, 0.5
        %v945 = vmul.f32 %v789, 0.5
        %v946 = vmul.f32 %v791, 0.5
        %v947 = vmul.f32 %v602, 0.5
        %v948 = vmul.f32 %v604, 0.5
        %v949 = vmul.f32 %v795, 0.5
        %v950 = vmul.f32 %v797, 0.5
        %v951 = vmul.f32 %v606, 0.5
        %v952 = vmul.f32 %v608, 0.5
        %v953 = vmul.f32 %v799, 0.5
        %v954 = vmul.f32 %v801, 0.5
        %v955 = vmul.f32 %v612, 0.5
        %v956 = vmul.f32 %v614, 0.5
        %v957 = vmul.f32 %v805, 0.5
        %v958 = vmul.f32 %v807, 0.5
        %v959 = vmul.f32 %v616, 0.5
        %v960 = vmul.f32 %v618, 0.5
        %v961 = vmul.f32 %v809, 0.5
        %v962 = vmul.f32 %v811, 0.5
        %v963 = vmul.f32 %v622, 0.5
        %v964 = vmul.f32 %v624, 0.5
        %v965 = vmul.f32 %v815, 0.5
        %v966 = vmul.f32 %v817, 0.5
        %v967 = vmul.f32 %v626, 0.5
        %v968 = vmul.f32 %v628, 0.5
        %v969 = vmul.f32 %v819, 0.5
        %v970 = vmul.f32 %v821, 0.5
        %v971 = vmul.f32 %v632, 0.5
        %v972 = vmul.f32 %v634, 0.5
        %v973 = vmul.f32 %v825, 0.5
        %v974 = vmul.f32 %v827, 0.5
        %v975 = vmul.f32 %v636, 0.5
        %v976 = vmul.f32 %v638, 0.5
        %v977 = vmul.f32 %v829, 0.5
        %v978 = vmul.f32 %v831, 0.5
        %v979 = vmul.f32 %v642, 0.5
        %v980 = vmul.f32 %v644, 0.5
        %v981 = vmul.f32 %v835, 0.5
        %v982 = vmul.f32 %v837, 0.5
        %v983 = vmul.f32 %v646, 0.5
        %v984 = vmul.f32 %v648, 0.5
        %v985 = vmul.f32 %v839, 0.5
        %v986 = vmul.f32 %v841, 0.5
        %v987 = vmul.f32 %v652, 0.5
        %v988 = vmul.f32 %v654, 0.5
        %v989 = vmul.f32 %v845, 0.5
        %v990 = vmul.f32 %v847, 0.5
        %v991 = vmul.f32 %v656, 0.5
        %v992 = vmul.f32 %v658, 0.5
        %v993 = vmul.f32 %v849, 0.5
        %v994 = vmul.f32 %v851, 0.5
        %v995 = vmul.f32 %v662, 0.5
        %v996 = vmul.f32 %v664, 0.5
        %v997 = vmul.f32 %v855, 0.5
        %v998 = vmul.f32 %v857, 0.5
        %v999 = vmul.f32 %v666, 0.5
        %v1000 = vmul.f32 %v668, 0.5
        %v1001 = vmul.f32 %v859, 0.5
        %v1002 = vmul.f32 %v861, 0.5
        %v1003 = vmul.f32 %v672, 0.5
        %v1004 = vmul.f32 %v674, 0.5
        %v1005 = vmul.f32 %v865, 0.5
        %v1006 = vmul.f32 %v867, 0.5
        %v1007 = vmul.f32 %v676, 0.5
        %v1008 = vmul.f32 %v678, 0.5
        %v1009 = vmul.f32 %v869, 0.5
        %v1010 = vmul.f32 %v871, 0.5
        %v1011 = vmul.f32 %v682, 0.5
        %v1012 = vmul.f32 %v684, 0.5
        %v1013 = vmul.f32 %v875, 0.5
        %v1014 = vmul.f32 %v877, 0.5
        %v1015 = vmul.f32 %v686, 0.5
        %v1016 = vmul.f32 %v688, 0.5
        %v1017 = vmul.f32 %v879, 0.5
        %v1018 = vmul.f32 %v881, 0.5
        %v1019 = vmul.f32 %v692, 0.5
        %v1020 = vmul.f32 %v694, 0.5
        %v1021 = vmul.f32 %v885, 0.5
        %v1022 = vmul.f32 %v887, 0.5
        %v1023 = vmul.f32 %v696, 0.5
        %v1024 = vmul.f32 %v698, 0.5
        %v1025 = vmul.f32 %v889, 0.5
        %v1026 = vmul.f32 %v891, 0.5
        %v1027 = vmul.f32 %v702, 0.5
        %v1028 = vmul.f32 %v704, 0.5
        %v1029 = vmul.f32 %v895, 0.5
        %v1030 = vmul.f32 %v897, 0.5
        %v1031 = vmul.f32 %v706, 0.5
        %v1032 = vmul.f32 %v708, 0.5
        %v1033 = vmul.f32 %v899, 0.5
        %v1034 = vmul.f32 %v901, 0.5
        %v1035 = vmul.f32 %v712, 0.5
        %v1036 = vmul.f32 %v714, 0.5
        %v1037 = vmul.f32 %v905, 0.5
        %v1038 = vmul.f32 %v907, 0.5
        %v1039 = vmul.f32 %v716, 0.5
        %v1040 = vmul.f32 %v718, 0.5
        %v1041 = vmul.f32 %v909, 0.5
        %v1042 = vmul.f32 %v911, 0.5
        %v1043 = vmul.f32 %v722, 0.5
        %v1044 = vmul.f32 %v724, 0.5
        %v1045 = vmul.f32 %v915, 0.5
        %v1046 = vmul.f32 %v917, 0.5
        %v1047 = vmul.f32 %v726, 0.5
        %v1048 = vmul.f32 %v728, 0.5
        %v1049 = vmul.f32 %v919, 0.5
        %v1050 = vmul.f32 %v921, 0.5
        %v1051 = vmul.f32 %v572, 0.70710677
        %v1052 = vmul.f32 %v574, 0.70710677
        %v1053 = vmul.f32 %v765, 0.70710677
        %v1054 = vmul.f32 %v767, 0.70710677
        %v1055 = vmul.f32 %v576, 0.70710677
        %v1056 = vmul.f32 %v578, 0.70710677
        %v1057 = vmul.f32 %v769, 0.70710677
        %v1058 = vmul.f32 %v771, 0.70710677
        %v1059 = vmul.f32 %v582, 0.70710677
        %v1060 = vmul.f32 %v584, 0.70710677
        %v1061 = vmul.f32 %v775, 0.70710677
        %v1062 = vmul.f32 %v777, 0.70710677
        %v1063 = vmul.f32 %v586, 0.70710677
        %v1064 = vmul.f32 %v588, 0.70710677
        %v1065 = vmul.f32 %v779, 0.70710677
        %v1066 = vmul.f32 %v781, 0.70710677
        %v1067 = vmul.f32 %v592, 0.70710677
        %v1068 = vmul.f32 %v594, 0.70710677
        %v1069 = vmul.f32 %v785, 0.70710677
        %v1070 = vmul.f32 %v787, 0.70710677
        %v1071 = vmul.f32 %v596, 0.70710677
        %v1072 = vmul.f32 %v598, 0.70710677
        %v1073 = vmul.f32 %v789, 0.70710677
        %v1074 = vmul.f32 %v791, 0.70710677
        %v1075 = vmul.f32 %v602, 0.70710677
        %v1076 = vmul.f32 %v604, 0.70710677
        %v1077 = vmul.f32 %v795, 0.70710677
        %v1078 = vmul.f32 %v797, 0.70710677
        %v1079 = vmul.f32 %v606, 0.70710677
        %v1080 = vmul.f32 %v608, 0.70710677
        %v1081 = vmul.f32 %v799, 0.70710677
        %v1082 = vmul.f32 %v801, 0.70710677
        %v1083 = vmul.f32 %v612, 0.70710677
        %v1084 = vmul.f32 %v614, 0.70710677
        %v1085 = vmul.f32 %v805, 0.70710677
        %v1086 = vmul.f32 %v807, 0.70710677
        %v1087 = vmul.f32 %v616, 0.70710677
        %v1088 = vmul.f32 %v618, 0.70710677
        %v1089 = vmul.f32 %v809, 0.70710677
        %v1090 = vmul.f32 %v811, 0.70710677
        %v1091 = vmul.f32 %v622, 0.70710677
        %v1092 = vmul.f32 %v624, 0.70710677
        %v1093 = vmul.f32 %v815, 0.70710677
        %v1094 = vmul.f32 %v817, 0.70710677
        %v1095 = vmul.f32 %v626, 0.70710677
        %v1096 = vmul.f32 %v628, 0.70710677
        %v1097 = vmul.f32 %v819, 0.70710677
        %v1098 = vmul.f32 %v821, 0.70710677
        %v1099 = vmul.f32 %v632, 0.70710677
        %v1100 = vmul.f32 %v634, 0.70710677
        %v1101 = vmul.f32 %v825, 0.70710677
        %v1102 = vmul.f32 %v827, 0.70710677
        %v1103 = vmul.f32 %v636, 0.70710677
        %v1104 = vmul.f32 %v638, 0.70710677
        %v1105 = vmul.f32 %v829, 0.70710677
        %v1106 = vmul.f32 %v831, 0.70710677
        %v1107 = vmul.f32 %v642, 0.70710677
        %v1108 = vmul.f32 %v644, 0.70710677
        %v1109 = vmul.f32 %v835, 0.70710677
        %v1110 = vmul.f32 %v837, 0.70710677
        %v1111 = vmul.f32 %v646, 0.70710677
        %v1112 = vmul.f32 %v648, 0.70710677
        %v1113 = vmul.f32 %v839, 0.70710677
        %v1114 = vmul.f32 %v841, 0.70710677
        %v1115 = vmul.f32 %v652, 0.70710677
        %v1116 = vmul.f32 %v654, 0.70710677
        %v1117 = vmul.f32 %v845, 0.70710677
        %v1118 = vmul.f32 %v847, 0.70710677
        %v1119 = vmul.f32 %v656, 0.70710677
        %v1120 = vmul.f32 %v658, 0.70710677
        %v1121 = vmul.f32 %v849, 0.70710677
        %v1122 = vmul.f32 %v851, 0.70710677
        %v1123 = vmul.f32 %v662, 0.70710677
        %v1124 = vmul.f32 %v664, 0.70710677
        %v1125 = vmul.f32 %v855, 0.70710677
        %v1126 = vmul.f32 %v857, 0.70710677
        %v1127 = vmul.f32 %v666, 0.70710677
        %v1128 = vmul.f32 %v668, 0.70710677
        %v1129 = vmul.f32 %v859, 0.70710677
        %v1130 = vmul.f32 %v861, 0.70710677
        %v1131 = vmul.f32 %v672, 0.70710677
        %v1132 = vmul.f32 %v674, 0.70710677
        %v1133 = vmul.f32 %v865, 0.70710677
        %v1134 = vmul.f32 %v867, 0.70710677
        %v1135 = vmul.f32 %v676, 0.70710677
        %v1136 = vmul.f32 %v678, 0.70710677
        %v1137 = vmul.f32 %v869, 0.70710677
        %v1138 = vmul.f32 %v871, 0.70710677
        %v1139 = vmul.f32 %v682, 0.70710677
        %v1140 = vmul.f32 %v684, 0.70710677
        %v1141 = vmul.f32 %v875, 0.70710677
        %v1142 = vmul.f32 %v877, 0.70710677
        %v1143 = vmul.f32 %v686, 0.70710677
        %v1144 = vmul.f32 %v688, 0.70710677
        %v1145 = vmul.f32 %v879, 0.70710677
        %v1146 = vmul.f32 %v881, 0.70710677
        %v1147 = vmul.f32 %v692, 0.70710677
        %v1148 = vmul.f32 %v694, 0.70710677
        %v1149 = vmul.f32 %v885, 0.70710677
        %v1150 = vmul.f32 %v887, 0.70710677
        %v1151 = vmul.f32 %v696, 0.70710677
        %v1152 = vmul.f32 %v698, 0.70710677
        %v1153 = vmul.f32 %v889, 0.70710677
        %v1154 = vmul.f32 %v891, 0.70710677
        %v1155 = vmul.f32 %v702, 0.70710677
        %v1156 = vmul.f32 %v704, 0.70710677
        %v1157 = vmul.f32 %v895, 0.70710677
        %v1158 = vmul.f32 %v897, 0.70710677
        %v1159 = vmul.f32 %v706, 0.70710677
        %v1160 = vmul.f32 %v708, 0.70710677
        %v1161 = vmul.f32 %v899, 0.70710677
        %v1162 = vmul.f32 %v901, 0.70710677
        %v1163 = vmul.f32 %v712, 0.70710677
        %v1164 = vmul.f32 %v714, 0.70710677
        %v1165 = vmul.f32 %v905, 0.70710677
        %v1166 = vmul.f32 %v907, 0.70710677
        %v1167 = vmul.f32 %v716, 0.70710677
        %v1168 = vmul.f32 %v718, 0.70710677
        %v1169 = vmul.f32 %v909, 0.70710677
        %v1170 = vmul.f32 %v911, 0.70710677
        %v1171 = vmul.f32 %v722, 0.70710677
        %v1172 = vmul.f32 %v724, 0.70710677
        %v1173 = vmul.f32 %v915, 0.70710677
        %v1174 = vmul.f32 %v917, 0.70710677
        %v1175 = vmul.f32 %v726, 0.70710677
        %v1176 = vmul.f32 %v728, 0.70710677
        %v1177 = vmul.f32 %v919, 0.70710677
        %v1178 = vmul.f32 %v921, 0.70710677
        %v1179 = verf.f32.pop %v1051
        %v1180 = verf.f32.pop %v1052
        %v1181 = verf.f32.pop %v1053
        %v1182 = verf.f32.pop %v1054
        %v1183 = verf.f32.pop %v1055
        %v1184 = verf.f32.pop %v1056
        %v1185 = verf.f32.pop %v1057
        %v1186 = verf.f32.pop %v1058
        %v1187 = verf.f32.pop %v1059
        %v1188 = verf.f32.pop %v1060
        %v1189 = verf.f32.pop %v1061
        %v1190 = verf.f32.pop %v1062
        %v1191 = verf.f32.pop %v1063
        %v1192 = verf.f32.pop %v1064
        %v1193 = verf.f32.pop %v1065
        %v1194 = verf.f32.pop %v1066
        %v1195 = verf.f32.pop %v1067
        %v1196 = verf.f32.pop %v1068
        %v1197 = verf.f32.pop %v1069
        %v1198 = verf.f32.pop %v1070
        %v1199 = verf.f32.pop %v1071
        %v1200 = verf.f32.pop %v1072
        %v1201 = verf.f32.pop %v1073
        %v1202 = verf.f32.pop %v1074
        %v1203 = verf.f32.pop %v1075
        %v1204 = verf.f32.pop %v1076
        %v1205 = verf.f32.pop %v1077
        %v1206 = verf.f32.pop %v1078
        %v1207 = verf.f32.pop %v1079
        %v1208 = verf.f32.pop %v1080
        %v1209 = verf.f32.pop %v1081
        %v1210 = verf.f32.pop %v1082
        %v1211 = verf.f32.pop %v1083
        %v1212 = verf.f32.pop %v1084
        %v1213 = verf.f32.pop %v1085
        %v1214 = verf.f32.pop %v1086
        %v1215 = verf.f32.pop %v1087
        %v1216 = verf.f32.pop %v1088
        %v1217 = verf.f32.pop %v1089
        %v1218 = verf.f32.pop %v1090
        %v1219 = verf.f32.pop %v1091
        %v1220 = verf.f32.pop %v1092
        %v1221 = verf.f32.pop %v1093
        %v1222 = verf.f32.pop %v1094
        %v1223 = verf.f32.pop %v1095
        %v1224 = verf.f32.pop %v1096
        %v1225 = verf.f32.pop %v1097
        %v1226 = verf.f32.pop %v1098
        %v1227 = verf.f32.pop %v1099
        %v1228 = verf.f32.pop %v1100
        %v1229 = verf.f32.pop %v1101
        %v1230 = verf.f32.pop %v1102
        %v1231 = verf.f32.pop %v1103
        %v1232 = verf.f32.pop %v1104
        %v1233 = verf.f32.pop %v1105
        %v1234 = verf.f32.pop %v1106
        %v1235 = verf.f32.pop %v1107
        %v1236 = verf.f32.pop %v1108
        %v1237 = verf.f32.pop %v1109
        %v1238 = verf.f32.pop %v1110
        %v1239 = verf.f32.pop %v1111
        %v1240 = verf.f32.pop %v1112
        %v1241 = verf.f32.pop %v1113
        %v1242 = verf.f32.pop %v1114
        %v1243 = verf.f32.pop %v1115
        %v1244 = verf.f32.pop %v1116
        %v1245 = verf.f32.pop %v1117
        %v1246 = verf.f32.pop %v1118
        %v1247 = verf.f32.pop %v1119
        %v1248 = verf.f32.pop %v1120
        %v1249 = verf.f32.pop %v1121
        %v1250 = verf.f32.pop %v1122
        %v1251 = verf.f32.pop %v1123
        %v1252 = verf.f32.pop %v1124
        %v1253 = verf.f32.pop %v1125
        %v1254 = verf.f32.pop %v1126
        %v1255 = verf.f32.pop %v1127
        %v1256 = verf.f32.pop %v1128
        %v1257 = verf.f32.pop %v1129
        %v1258 = verf.f32.pop %v1130
        %v1259 = verf.f32.pop %v1131
        %v1260 = verf.f32.pop %v1132
        %v1261 = verf.f32.pop %v1133
        %v1262 = verf.f32.pop %v1134
        %v1263 = verf.f32.pop %v1135
        %v1264 = verf.f32.pop %v1136
        %v1265 = verf.f32.pop %v1137
        %v1266 = verf.f32.pop %v1138
        %v1267 = verf.f32.pop %v1139
        %v1268 = verf.f32.pop %v1140
        %v1269 = verf.f32.pop %v1141
        %v1270 = verf.f32.pop %v1142
        %v1271 = verf.f32.pop %v1143
        %v1272 = verf.f32.pop %v1144
        %v1273 = verf.f32.pop %v1145
        %v1274 = verf.f32.pop %v1146
        %v1275 = verf.f32.pop %v1147
        %v1276 = verf.f32.pop %v1148
        %v1277 = verf.f32.pop %v1149
        %v1278 = verf.f32.pop %v1150
        %v1279 = verf.f32.pop %v1151
        %v1280 = verf.f32.pop %v1152
        %v1281 = verf.f32.pop %v1153
        %v1282 = verf.f32.pop %v1154
        %v1283 = verf.f32.pop %v1155
        %v1284 = verf.f32.pop %v1156
        %v1285 = verf.f32.pop %v1157
        %v1286 = verf.f32.pop %v1158
        %v1287 = verf.f32.pop %v1159
        %v1288 = verf.f32.pop %v1160
        %v1289 = verf.f32.pop %v1161
        %v1290 = verf.f32.pop %v1162
        %v1291 = verf.f32.pop %v1163
        %v1292 = verf.f32.pop %v1164
        %v1293 = verf.f32.pop %v1165
        %v1294 = verf.f32.pop %v1166
        %v1295 = verf.f32.pop %v1167
        %v1296 = verf.f32.pop %v1168
        %v1297 = verf.f32.pop %v1169
        %v1298 = verf.f32.pop %v1170
        %v1299 = verf.f32.pop %v1171
        %v1300 = verf.f32.pop %v1172
        %v1301 = verf.f32.pop %v1173
        %v1302 = verf.f32.pop %v1174
        %v1303 = verf.f32.pop %v1175
        %v1304 = verf.f32.pop %v1176
        %v1305 = verf.f32.pop %v1177
        %v1306 = verf.f32.pop %v1178
        %v1307 = vadd.f32 %v1179, 1.0
        %v1308 = vadd.f32 %v1180, 1.0
        %v1309 = vadd.f32 %v1181, 1.0
        %v1310 = vadd.f32 %v1182, 1.0
        %v1311 = vadd.f32 %v1183, 1.0
        %v1312 = vadd.f32 %v1184, 1.0
        %v1313 = vadd.f32 %v1185, 1.0
        %v1314 = vadd.f32 %v1186, 1.0
        %v1315 = vadd.f32 %v1187, 1.0
        %v1316 = vadd.f32 %v1188, 1.0
        %v1317 = vadd.f32 %v1189, 1.0
        %v1318 = vadd.f32 %v1190, 1.0
        %v1319 = vadd.f32 %v1191, 1.0
        %v1320 = vadd.f32 %v1192, 1.0
        %v1321 = vadd.f32 %v1193, 1.0
        %v1322 = vadd.f32 %v1194, 1.0
        %v1323 = vadd.f32 %v1195, 1.0
        %v1324 = vadd.f32 %v1196, 1.0
        %v1325 = vadd.f32 %v1197, 1.0
        %v1326 = vadd.f32 %v1198, 1.0
        %v1327 = vadd.f32 %v1199, 1.0
        %v1328 = vadd.f32 %v1200, 1.0
        %v1329 = vadd.f32 %v1201, 1.0
        %v1330 = vadd.f32 %v1202, 1.0
        %v1331 = vadd.f32 %v1203, 1.0
        %v1332 = vadd.f32 %v1204, 1.0
        %v1333 = vadd.f32 %v1205, 1.0
        %v1334 = vadd.f32 %v1206, 1.0
        %v1335 = vadd.f32 %v1207, 1.0
        %v1336 = vadd.f32 %v1208, 1.0
        %v1337 = vadd.f32 %v1209, 1.0
        %v1338 = vadd.f32 %v1210, 1.0
        %v1339 = vadd.f32 %v1211, 1.0
        %v1340 = vadd.f32 %v1212, 1.0
        %v1341 = vadd.f32 %v1213, 1.0
        %v1342 = vadd.f32 %v1214, 1.0
        %v1343 = vadd.f32 %v1215, 1.0
        %v1344 = vadd.f32 %v1216, 1.0
        %v1345 = vadd.f32 %v1217, 1.0
        %v1346 = vadd.f32 %v1218, 1.0
        %v1347 = vadd.f32 %v1219, 1.0
        %v1348 = vadd.f32 %v1220, 1.0
        %v1349 = vadd.f32 %v1221, 1.0
        %v1350 = vadd.f32 %v1222, 1.0
        %v1351 = vadd.f32 %v1223, 1.0
        %v1352 = vadd.f32 %v1224, 1.0
        %v1353 = vadd.f32 %v1225, 1.0
        %v1354 = vadd.f32 %v1226, 1.0
        %v1355 = vadd.f32 %v1227, 1.0
        %v1356 = vadd.f32 %v1228, 1.0
        %v1357 = vadd.f32 %v1229, 1.0
        %v1358 = vadd.f32 %v1230, 1.0
        %v1359 = vadd.f32 %v1231, 1.0
        %v1360 = vadd.f32 %v1232, 1.0
        %v1361 = vadd.f32 %v1233, 1.0
        %v1362 = vadd.f32 %v1234, 1.0
        %v1363 = vadd.f32 %v1235, 1.0
        %v1364 = vadd.f32 %v1236, 1.0
        %v1365 = vadd.f32 %v1237, 1.0
        %v1366 = vadd.f32 %v1238, 1.0
        %v1367 = vadd.f32 %v1239, 1.0
        %v1368 = vadd.f32 %v1240, 1.0
        %v1369 = vadd.f32 %v1241, 1.0
        %v1370 = vadd.f32 %v1242, 1.0
        %v1371 = vadd.f32 %v1243, 1.0
        %v1372 = vadd.f32 %v1244, 1.0
        %v1373 = vadd.f32 %v1245, 1.0
        %v1374 = vadd.f32 %v1246, 1.0
        %v1375 = vadd.f32 %v1247, 1.0
        %v1376 = vadd.f32 %v1248, 1.0
        %v1377 = vadd.f32 %v1249, 1.0
        %v1378 = vadd.f32 %v1250, 1.0
        %v1379 = vadd.f32 %v1251, 1.0
        %v1380 = vadd.f32 %v1252, 1.0
        %v1381 = vadd.f32 %v1253, 1.0
        %v1382 = vadd.f32 %v1254, 1.0
        %v1383 = vadd.f32 %v1255, 1.0
        %v1384 = vadd.f32 %v1256, 1.0
        %v1385 = vadd.f32 %v1257, 1.0
        %v1386 = vadd.f32 %v1258, 1.0
        %v1387 = vadd.f32 %v1259, 1.0
        %v1388 = vadd.f32 %v1260, 1.0
        %v1389 = vadd.f32 %v1261, 1.0
        %v1390 = vadd.f32 %v1262, 1.0
        %v1391 = vadd.f32 %v1263, 1.0
        %v1392 = vadd.f32 %v1264, 1.0
        %v1393 = vadd.f32 %v1265, 1.0
        %v1394 = vadd.f32 %v1266, 1.0
        %v1395 = vadd.f32 %v1267, 1.0
        %v1396 = vadd.f32 %v1268, 1.0
        %v1397 = vadd.f32 %v1269, 1.0
        %v1398 = vadd.f32 %v1270, 1.0
        %v1399 = vadd.f32 %v1271, 1.0
        %v1400 = vadd.f32 %v1272, 1.0
        %v1401 = vadd.f32 %v1273, 1.0
        %v1402 = vadd.f32 %v1274, 1.0
        %v1403 = vadd.f32 %v1275, 1.0
        %v1404 = vadd.f32 %v1276, 1.0
        %v1405 = vadd.f32 %v1277, 1.0
        %v1406 = vadd.f32 %v1278, 1.0
        %v1407 = vadd.f32 %v1279, 1.0
        %v1408 = vadd.f32 %v1280, 1.0
        %v1409 = vadd.f32 %v1281, 1.0
        %v1410 = vadd.f32 %v1282, 1.0
        %v1411 = vadd.f32 %v1283, 1.0
        %v1412 = vadd.f32 %v1284, 1.0
        %v1413 = vadd.f32 %v1285, 1.0
        %v1414 = vadd.f32 %v1286, 1.0
        %v1415 = vadd.f32 %v1287, 1.0
        %v1416 = vadd.f32 %v1288, 1.0
        %v1417 = vadd.f32 %v1289, 1.0
        %v1418 = vadd.f32 %v1290, 1.0
        %v1419 = vadd.f32 %v1291, 1.0
        %v1420 = vadd.f32 %v1292, 1.0
        %v1421 = vadd.f32 %v1293, 1.0
        %v1422 = vadd.f32 %v1294, 1.0
        %v1423 = vadd.f32 %v1295, 1.0
        %v1424 = vadd.f32 %v1296, 1.0
        %v1425 = vadd.f32 %v1297, 1.0
        %v1426 = vadd.f32 %v1298, 1.0
        %v1427 = vadd.f32 %v1299, 1.0
        %v1428 = vadd.f32 %v1300, 1.0
        %v1429 = vadd.f32 %v1301, 1.0
        %v1430 = vadd.f32 %v1302, 1.0
        %v1431 = vadd.f32 %v1303, 1.0
        %v1432 = vadd.f32 %v1304, 1.0
        %v1433 = vadd.f32 %v1305, 1.0
        %v1434 = vadd.f32 %v1306, 1.0
        %v1435 = vmul.f32 %v923, %v1307
        %v1436 = vmul.f32 %v924, %v1308
        %v1437 = vmul.f32 %v925, %v1309
        %v1438 = vmul.f32 %v926, %v1310
        %v1439 = vmul.f32 %v927, %v1311
        %v1440 = vmul.f32 %v928, %v1312
        %v1441 = vmul.f32 %v929, %v1313
        %v1442 = vmul.f32 %v930, %v1314
        %v1443 = vmul.f32 %v931, %v1315
        %v1444 = vmul.f32 %v932, %v1316
        %v1445 = vmul.f32 %v933, %v1317
        %v1446 = vmul.f32 %v934, %v1318
        %v1447 = vmul.f32 %v935, %v1319
        %v1448 = vmul.f32 %v936, %v1320
        %v1449 = vmul.f32 %v937, %v1321
        %v1450 = vmul.f32 %v938, %v1322
        %v1451 = vmul.f32 %v939, %v1323
        %v1452 = vmul.f32 %v940, %v1324
        %v1453 = vmul.f32 %v941, %v1325
        %v1454 = vmul.f32 %v942, %v1326
        %v1455 = vmul.f32 %v943, %v1327
        %v1456 = vmul.f32 %v944, %v1328
        %v1457 = vmul.f32 %v945, %v1329
        %v1458 = vmul.f32 %v946, %v1330
        %v1459 = vmul.f32 %v947, %v1331
        %v1460 = vmul.f32 %v948, %v1332
        %v1461 = vmul.f32 %v949, %v1333
        %v1462 = vmul.f32 %v950, %v1334
        %v1463 = vmul.f32 %v951, %v1335
        %v1464 = vmul.f32 %v952, %v1336
        %v1465 = vmul.f32 %v953, %v1337
        %v1466 = vmul.f32 %v954, %v1338
        %v1467 = vmul.f32 %v955, %v1339
        %v1468 = vmul.f32 %v956, %v1340
        %v1469 = vmul.f32 %v957, %v1341
        %v1470 = vmul.f32 %v958, %v1342
        %v1471 = vmul.f32 %v959, %v1343
        %v1472 = vmul.f32 %v960, %v1344
        %v1473 = vmul.f32 %v961, %v1345
        %v1474 = vmul.f32 %v962, %v1346
        %v1475 = vmul.f32 %v963, %v1347
        %v1476 = vmul.f32 %v964, %v1348
        %v1477 = vmul.f32 %v965, %v1349
        %v1478 = vmul.f32 %v966, %v1350
        %v1479 = vmul.f32 %v967, %v1351
        %v1480 = vmul.f32 %v968, %v1352
        %v1481 = vmul.f32 %v969, %v1353
        %v1482 = vmul.f32 %v970, %v1354
        %v1483 = vmul.f32 %v971, %v1355
        %v1484 = vmul.f32 %v972, %v1356
        %v1485 = vmul.f32 %v973, %v1357
        %v1486 = vmul.f32 %v974, %v1358
        %v1487 = vmul.f32 %v975, %v1359
        %v1488 = vmul.f32 %v976, %v1360
        %v1489 = vmul.f32 %v977, %v1361
        %v1490 = vmul.f32 %v978, %v1362
        %v1491 = vmul.f32 %v979, %v1363
        %v1492 = vmul.f32 %v980, %v1364
        %v1493 = vmul.f32 %v981, %v1365
        %v1494 = vmul.f32 %v982, %v1366
        %v1495 = vmul.f32 %v983, %v1367
        %v1496 = vmul.f32 %v984, %v1368
        %v1497 = vmul.f32 %v985, %v1369
        %v1498 = vmul.f32 %v986, %v1370
        %v1499 = vmul.f32 %v987, %v1371
        %v1500 = vmul.f32 %v988, %v1372
        %v1501 = vmul.f32 %v989, %v1373
        %v1502 = vmul.f32 %v990, %v1374
        %v1503 = vmul.f32 %v991, %v1375
        %v1504 = vmul.f32 %v992, %v1376
        %v1505 = vmul.f32 %v993, %v1377
        %v1506 = vmul.f32 %v994, %v1378
        %v1507 = vmul.f32 %v995, %v1379
        %v1508 = vmul.f32 %v996, %v1380
        %v1509 = vmul.f32 %v997, %v1381
        %v1510 = vmul.f32 %v998, %v1382
        %v1511 = vmul.f32 %v999, %v1383
        %v1512 = vmul.f32 %v1000, %v1384
        %v1513 = vmul.f32 %v1001, %v1385
        %v1514 = vmul.f32 %v1002, %v1386
        %v1515 = vmul.f32 %v1003, %v1387
        %v1516 = vmul.f32 %v1004, %v1388
        %v1517 = vmul.f32 %v1005, %v1389
        %v1518 = vmul.f32 %v1006, %v1390
        %v1519 = vmul.f32 %v1007, %v1391
        %v1520 = vmul.f32 %v1008, %v1392
        %v1521 = vmul.f32 %v1009, %v1393
        %v1522 = vmul.f32 %v1010, %v1394
        %v1523 = vmul.f32 %v1011, %v1395
        %v1524 = vmul.f32 %v1012, %v1396
        %v1525 = vmul.f32 %v1013, %v1397
        %v1526 = vmul.f32 %v1014, %v1398
        %v1527 = vmul.f32 %v1015, %v1399
        %v1528 = vmul.f32 %v1016, %v1400
        %v1529 = vmul.f32 %v1017, %v1401
        %v1530 = vmul.f32 %v1018, %v1402
        %v1531 = vmul.f32 %v1019, %v1403
        %v1532 = vmul.f32 %v1020, %v1404
        %v1533 = vmul.f32 %v1021, %v1405
        %v1534 = vmul.f32 %v1022, %v1406
        %v1535 = vmul.f32 %v1023, %v1407
        %v1536 = vmul.f32 %v1024, %v1408
        %v1537 = vmul.f32 %v1025, %v1409
        %v1538 = vmul.f32 %v1026, %v1410
        %v1539 = vmul.f32 %v1027, %v1411
        %v1540 = vmul.f32 %v1028, %v1412
        %v1541 = vmul.f32 %v1029, %v1413
        %v1542 = vmul.f32 %v1030, %v1414
        %v1543 = vmul.f32 %v1031, %v1415
        %v1544 = vmul.f32 %v1032, %v1416
        %v1545 = vmul.f32 %v1033, %v1417
        %v1546 = vmul.f32 %v1034, %v1418
        %v1547 = vmul.f32 %v1035, %v1419
        %v1548 = vmul.f32 %v1036, %v1420
        %v1549 = vmul.f32 %v1037, %v1421
        %v1550 = vmul.f32 %v1038, %v1422
        %v1551 = vmul.f32 %v1039, %v1423
        %v1552 = vmul.f32 %v1040, %v1424
        %v1553 = vmul.f32 %v1041, %v1425
        %v1554 = vmul.f32 %v1042, %v1426
        %v1555 = vmul.f32 %v1043, %v1427
        %v1556 = vmul.f32 %v1044, %v1428
        %v1557 = vmul.f32 %v1045, %v1429
        %v1558 = vmul.f32 %v1046, %v1430
        %v1559 = vmul.f32 %v1047, %v1431
        %v1560 = vmul.f32 %v1048, %v1432
        %v1561 = vmul.f32 %v1049, %v1433
        %v1562 = vmul.f32 %v1050, %v1434
        %v1563 = vpack.c.bf16 %v1439, %v1435
        %v1564 = vpack.c.bf16 %v1440, %v1436
        %v1565 = vpack.c.bf16 %v1441, %v1437
        %v1566 = vpack.c.bf16 %v1442, %v1438
        %v1567 = vpack.c.bf16 %v1447, %v1443
        %v1568 = vpack.c.bf16 %v1448, %v1444
        %v1569 = vpack.c.bf16 %v1449, %v1445
        %v1570 = vpack.c.bf16 %v1450, %v1446
        %v1571 = vpack.c.bf16 %v1455, %v1451
        %v1572 = vpack.c.bf16 %v1456, %v1452
        %v1573 = vpack.c.bf16 %v1457, %v1453
        %v1574 = vpack.c.bf16 %v1458, %v1454
        %v1575 = vpack.c.bf16 %v1463, %v1459
        %v1576 = vpack.c.bf16 %v1464, %v1460
        %v1577 = vpack.c.bf16 %v1465, %v1461
        %v1578 = vpack.c.bf16 %v1466, %v1462
        %v1579 = vpack.c.bf16 %v1471, %v1467
        %v1580 = vpack.c.bf16 %v1472, %v1468
        %v1581 = vpack.c.bf16 %v1473, %v1469
        %v1582 = vpack.c.bf16 %v1474, %v1470
        %v1583 = vpack.c.bf16 %v1479, %v1475
        %v1584 = vpack.c.bf16 %v1480, %v1476
        %v1585 = vpack.c.bf16 %v1481, %v1477
        %v1586 = vpack.c.bf16 %v1482, %v1478
        %v1587 = vpack.c.bf16 %v1487, %v1483
        %v1588 = vpack.c.bf16 %v1488, %v1484
        %v1589 = vpack.c.bf16 %v1489, %v1485
        %v1590 = vpack.c.bf16 %v1490, %v1486
        %v1591 = vpack.c.bf16 %v1495, %v1491
        %v1592 = vpack.c.bf16 %v1496, %v1492
        %v1593 = vpack.c.bf16 %v1497, %v1493
        %v1594 = vpack.c.bf16 %v1498, %v1494
        %v1595 = vpack.c.bf16 %v1503, %v1499
        %v1596 = vpack.c.bf16 %v1504, %v1500
        %v1597 = vpack.c.bf16 %v1505, %v1501
        %v1598 = vpack.c.bf16 %v1506, %v1502
        %v1599 = vpack.c.bf16 %v1511, %v1507
        %v1600 = vpack.c.bf16 %v1512, %v1508
        %v1601 = vpack.c.bf16 %v1513, %v1509
        %v1602 = vpack.c.bf16 %v1514, %v1510
        %v1603 = vpack.c.bf16 %v1519, %v1515
        %v1604 = vpack.c.bf16 %v1520, %v1516
        %v1605 = vpack.c.bf16 %v1521, %v1517
        %v1606 = vpack.c.bf16 %v1522, %v1518
        %v1607 = vpack.c.bf16 %v1527, %v1523
        %v1608 = vpack.c.bf16 %v1528, %v1524
        %v1609 = vpack.c.bf16 %v1529, %v1525
        %v1610 = vpack.c.bf16 %v1530, %v1526
        %v1611 = vpack.c.bf16 %v1535, %v1531
        %v1612 = vpack.c.bf16 %v1536, %v1532
        %v1613 = vpack.c.bf16 %v1537, %v1533
        %v1614 = vpack.c.bf16 %v1538, %v1534
        %v1615 = vpack.c.bf16 %v1543, %v1539
        %v1616 = vpack.c.bf16 %v1544, %v1540
        %v1617 = vpack.c.bf16 %v1545, %v1541
        %v1618 = vpack.c.bf16 %v1546, %v1542
        %v1619 = vpack.c.bf16 %v1551, %v1547
        %v1620 = vpack.c.bf16 %v1552, %v1548
        %v1621 = vpack.c.bf16 %v1553, %v1549
        %v1622 = vpack.c.bf16 %v1554, %v1550
        %v1623 = vpack.c.bf16 %v1559, %v1555
        %v1624 = vpack.c.bf16 %v1560, %v1556
        %v1625 = vpack.c.bf16 %v1561, %v1557
        %v1626 = vpack.c.bf16 %v1562, %v1558
        %v1627 = vld [vmem:[#allocation7] sm:$0xf]
        %v1628 = vld [vmem:[#allocation7 + $0x4] sm:$0xf]
        %v1629 = vld [vmem:[#allocation7 + $0x8] sm:$0xf]
        %v1630 = vld [vmem:[#allocation7 + $0xc] sm:$0xf]
        %v1631 = vld [vmem:[#allocation7 + $0x10] sm:$0xf]
        %v1632 = vld [vmem:[#allocation7 + $0x14] sm:$0xf]
        %v1633 = vld [vmem:[#allocation7 + $0x18] sm:$0xf]
        %v1634 = vld [vmem:[#allocation7 + $0x1c] sm:$0xf]
        %v1635 = vld [vmem:[#allocation7 + $0x20] sm:$0xf]
        %v1636 = vld [vmem:[#allocation7 + $0x24] sm:$0xf]
        %v1637 = vld [vmem:[#allocation7 + $0x28] sm:$0xf]
        %v1638 = vld [vmem:[#allocation7 + $0x2c] sm:$0xf]
        %v1639 = vld [vmem:[#allocation7 + $0x30] sm:$0xf]
        %v1640 = vld [vmem:[#allocation7 + $0x34] sm:$0xf]
        %v1641 = vld [vmem:[#allocation7 + $0x38] sm:$0xf]
        %v1642 = vld [vmem:[#allocation7 + $0x3c] sm:$0xf]
        %v1643 = vld [vmem:[#allocation7 + $0x40] sm:$0xf]
        %v1644 = vld [vmem:[#allocation7 + $0x44] sm:$0xf]
        %v1645 = vld [vmem:[#allocation7 + $0x48] sm:$0xf]
        %v1646 = vld [vmem:[#allocation7 + $0x4c] sm:$0xf]
        %v1647 = vld [vmem:[#allocation7 + $0x50] sm:$0xf]
        %v1648 = vld [vmem:[#allocation7 + $0x54] sm:$0xf]
        %v1649 = vld [vmem:[#allocation7 + $0x58] sm:$0xf]
        %v1650 = vld [vmem:[#allocation7 + $0x5c] sm:$0xf]
        %v1651 = vld [vmem:[#allocation7 + $0x60] sm:$0xf]
        %v1652 = vld [vmem:[#allocation7 + $0x64] sm:$0xf]
        %v1653 = vld [vmem:[#allocation7 + $0x68] sm:$0xf]
        %v1654 = vld [vmem:[#allocation7 + $0x6c] sm:$0xf]
        %v1655 = vld [vmem:[#allocation7 + $0x70] sm:$0xf]
        %v1656 = vld [vmem:[#allocation7 + $0x74] sm:$0xf]
        %v1657 = vld [vmem:[#allocation7 + $0x78] sm:$0xf]
        %v1658 = vld [vmem:[#allocation7 + $0x7c] sm:$0xf]
        %v1659 = vld [vmem:[#allocation7 + $0x80] sm:$0xf]
        %v1660 = vld [vmem:[#allocation7 + $0x84] sm:$0xf]
        %v1661 = vld [vmem:[#allocation7 + $0x88] sm:$0xf]
        %v1662 = vld [vmem:[#allocation7 + $0x8c] sm:$0xf]
        %v1663 = vld [vmem:[#allocation7 + $0x90] sm:$0xf]
        %v1664 = vld [vmem:[#allocation7 + $0x94] sm:$0xf]
        %v1665 = vld [vmem:[#allocation7 + $0x98] sm:$0xf]
        %v1666 = vld [vmem:[#allocation7 + $0x9c] sm:$0xf]
        %v1667 = vld [vmem:[#allocation7 + $0xa0] sm:$0xf]
        %v1668 = vld [vmem:[#allocation7 + $0xa4] sm:$0xf]
        %v1669 = vld [vmem:[#allocation7 + $0xa8] sm:$0xf]
        %v1670 = vld [vmem:[#allocation7 + $0xac] sm:$0xf]
        %v1671 = vld [vmem:[#allocation7 + $0xb0] sm:$0xf]
        %v1672 = vld [vmem:[#allocation7 + $0xb4] sm:$0xf]
        %v1673 = vld [vmem:[#allocation7 + $0xb8] sm:$0xf]
        %v1674 = vld [vmem:[#allocation7 + $0xbc] sm:$0xf]
        %v1675 = vld [vmem:[#allocation7 + $0xc0] sm:$0xf]
        %v1676 = vld [vmem:[#allocation7 + $0xc4] sm:$0xf]
        %v1677 = vld [vmem:[#allocation7 + $0xc8] sm:$0xf]
        %v1678 = vld [vmem:[#allocation7 + $0xcc] sm:$0xf]
        %v1679 = vld [vmem:[#allocation7 + $0xd0] sm:$0xf]
        %v1680 = vld [vmem:[#allocation7 + $0xd4] sm:$0xf]
        %v1681 = vld [vmem:[#allocation7 + $0xd8] sm:$0xf]
        %v1682 = vld [vmem:[#allocation7 + $0xdc] sm:$0xf]
        %v1683 = vld [vmem:[#allocation7 + $0xe0] sm:$0xf]
        %v1684 = vld [vmem:[#allocation7 + $0xe4] sm:$0xf]
        %v1685 = vld [vmem:[#allocation7 + $0xe8] sm:$0xf]
        %v1686 = vld [vmem:[#allocation7 + $0xec] sm:$0xf]
        %v1687 = vld [vmem:[#allocation7 + $0xf0] sm:$0xf]
        %v1688 = vld [vmem:[#allocation7 + $0xf4] sm:$0xf]
        %v1689 = vld [vmem:[#allocation7 + $0xf8] sm:$0xf]
        %v1690 = vld [vmem:[#allocation7 + $0xfc] sm:$0xf]
        %v1691 = vld [vmem:[%s4] sm:$0x1]
        %v1693 = vlaneseq
        %v1694 = vshrl.u32 %v1693, 7
        %v1695 = vsub.s32 0, %v1694
        %v1696 = vrot.slane %v1691, %v1695
        %v1762 = vunpack.c.l.b16 %v1627
        %v1763 = vunpack.c.l.b16 %v1628
        %v1764 = vunpack.c.l.b16 %v1629
        %v1765 = vunpack.c.l.b16 %v1630
        %v1766 = vunpack.c.l.b16 %v1631
        %v1767 = vunpack.c.l.b16 %v1632
        %v1768 = vunpack.c.l.b16 %v1633
        %v1769 = vunpack.c.l.b16 %v1634
        %v1770 = vunpack.c.l.b16 %v1635
        %v1771 = vunpack.c.l.b16 %v1636
        %v1772 = vunpack.c.l.b16 %v1637
        %v1773 = vunpack.c.l.b16 %v1638
        %v1774 = vunpack.c.l.b16 %v1639
        %v1775 = vunpack.c.l.b16 %v1640
        %v1776 = vunpack.c.l.b16 %v1641
        %v1777 = vunpack.c.l.b16 %v1642
        %v1778 = vunpack.c.l.b16 %v1643
        %v1779 = vunpack.c.l.b16 %v1644
        %v1780 = vunpack.c.l.b16 %v1645
        %v1781 = vunpack.c.l.b16 %v1646
        %v1782 = vunpack.c.l.b16 %v1647
        %v1783 = vunpack.c.l.b16 %v1648
        %v1784 = vunpack.c.l.b16 %v1649
        %v1785 = vunpack.c.l.b16 %v1650
        %v1786 = vunpack.c.l.b16 %v1651
        %v1787 = vunpack.c.l.b16 %v1652
        %v1788 = vunpack.c.l.b16 %v1653
        %v1789 = vunpack.c.l.b16 %v1654
        %v1790 = vunpack.c.l.b16 %v1655
        %v1791 = vunpack.c.l.b16 %v1656
        %v1792 = vunpack.c.l.b16 %v1657
        %v1793 = vunpack.c.l.b16 %v1658
        %v1794 = vunpack.c.l.b16 %v1659
        %v1795 = vunpack.c.l.b16 %v1660
        %v1796 = vunpack.c.l.b16 %v1661
        %v1797 = vunpack.c.l.b16 %v1662
        %v1798 = vunpack.c.l.b16 %v1663
        %v1799 = vunpack.c.l.b16 %v1664
        %v1800 = vunpack.c.l.b16 %v1665
        %v1801 = vunpack.c.l.b16 %v1666
        %v1802 = vunpack.c.l.b16 %v1667
        %v1803 = vunpack.c.l.b16 %v1668
        %v1804 = vunpack.c.l.b16 %v1669
        %v1805 = vunpack.c.l.b16 %v1670
        %v1806 = vunpack.c.l.b16 %v1671
        %v1807 = vunpack.c.l.b16 %v1672
        %v1808 = vunpack.c.l.b16 %v1673
        %v1809 = vunpack.c.l.b16 %v1674
        %v1810 = vunpack.c.l.b16 %v1675
        %v1811 = vunpack.c.l.b16 %v1676
        %v1812 = vunpack.c.l.b16 %v1677
        %v1813 = vunpack.c.l.b16 %v1678
        %v1814 = vunpack.c.l.b16 %v1679
        %v1815 = vunpack.c.l.b16 %v1680
        %v1816 = vunpack.c.l.b16 %v1681
        %v1817 = vunpack.c.l.b16 %v1682
        %v1818 = vunpack.c.l.b16 %v1683
        %v1819 = vunpack.c.l.b16 %v1684
        %v1820 = vunpack.c.l.b16 %v1685
        %v1821 = vunpack.c.l.b16 %v1686
        %v1822 = vunpack.c.l.b16 %v1687
        %v1823 = vunpack.c.l.b16 %v1688
        %v1824 = vunpack.c.l.b16 %v1689
        %v1825 = vunpack.c.l.b16 %v1690
        %v1826 = vpack.c.b16 %v1763, %v1762
        %v1827 = vpack.c.b16 %v1765, %v1764
        %v1828 = vpack.c.b16 %v1767, %v1766
        %v1829 = vpack.c.b16 %v1769, %v1768
        %v1830 = vpack.c.b16 %v1771, %v1770
        %v1831 = vpack.c.b16 %v1773, %v1772
        %v1832 = vpack.c.b16 %v1775, %v1774
        %v1833 = vpack.c.b16 %v1777, %v1776
        %v1834 = vpack.c.b16 %v1779, %v1778
        %v1835 = vpack.c.b16 %v1781, %v1780
        %v1836 = vpack.c.b16 %v1783, %v1782
        %v1837 = vpack.c.b16 %v1785, %v1784
        %v1838 = vpack.c.b16 %v1787, %v1786
        %v1839 = vpack.c.b16 %v1789, %v1788
        %v1840 = vpack.c.b16 %v1791, %v1790
        %v1841 = vpack.c.b16 %v1793, %v1792
        %v1842 = vpack.c.b16 %v1795, %v1794
        %v1843 = vpack.c.b16 %v1797, %v1796
        %v1844 = vpack.c.b16 %v1799, %v1798
        %v1845 = vpack.c.b16 %v1801, %v1800
        %v1846 = vpack.c.b16 %v1803, %v1802
        %v1847 = vpack.c.b16 %v1805, %v1804
        %v1848 = vpack.c.b16 %v1807, %v1806
        %v1849 = vpack.c.b16 %v1809, %v1808
        %v1850 = vpack.c.b16 %v1811, %v1810
        %v1851 = vpack.c.b16 %v1813, %v1812
        %v1852 = vpack.c.b16 %v1815, %v1814
        %v1853 = vpack.c.b16 %v1817, %v1816
        %v1854 = vpack.c.b16 %v1819, %v1818
        %v1855 = vpack.c.b16 %v1821, %v1820
        %v1856 = vpack.c.b16 %v1823, %v1822
        %v1857 = vpack.c.b16 %v1825, %v1824
        %1890 = vmatprep.subr.bf16.mxu0 0
        %1891 = vmatpush1.bf16.msra.mxu0 %v1826
        %1892 = vmatprep.subr.bf16.mxu0 0
        %1893 = vmatpush1.bf16.msra.mxu0 %v1827
        %1894 = vmatprep.subr.bf16.mxu0 0
        %1895 = vmatpush1.bf16.msra.mxu0 %v1828
        %1896 = vmatprep.subr.bf16.mxu0 0
        %1897 = vmatpush1.bf16.msra.mxu0 %v1829
        %1898 = vmatprep.subr.bf16.mxu0 0
        %1899 = vmatpush1.bf16.msra.mxu0 %v1830
        %1900 = vmatprep.subr.bf16.mxu0 0
        %1901 = vmatpush1.bf16.msra.mxu0 %v1831
        %1902 = vmatprep.subr.bf16.mxu0 0
        %1903 = vmatpush1.bf16.msra.mxu0 %v1832
        %1904 = vmatprep.subr.bf16.mxu0 0
        %1905 = vmatpush1.bf16.msra.mxu0 %v1833
        %1906 = vmatprep.subr.bf16.mxu0 0
        %1907 = vmatpush1.bf16.msra.mxu0 %v1834
        %1908 = vmatprep.subr.bf16.mxu0 0
        %1909 = vmatpush1.bf16.msra.mxu0 %v1835
        %1910 = vmatprep.subr.bf16.mxu0 0
        %1911 = vmatpush1.bf16.msra.mxu0 %v1836
        %1912 = vmatprep.subr.bf16.mxu0 0
        %1913 = vmatpush1.bf16.msra.mxu0 %v1837
        %1914 = vmatprep.subr.bf16.mxu0 0
        %1915 = vmatpush1.bf16.msra.mxu0 %v1838
        %1916 = vmatprep.subr.bf16.mxu0 0
        %1917 = vmatpush1.bf16.msra.mxu0 %v1839
        %1918 = vmatprep.subr.bf16.mxu0 0
        %1919 = vmatpush1.bf16.msra.mxu0 %v1840
        %1920 = vmatprep.subr.bf16.mxu0 0
        %1921 = vmatpush1.bf16.msra.mxu0 %v1841
        %1922 = vmatprep.mubr.bf16.mxu0 %v1564
        %1923 = vmatmul.mubr.bf16.gmra.mrb[0].mxu0 %v1563
        %v1924 = vpop.f32.mrb[0].mxu0
        %v1925 = vadd.f32 %v1696, %v1924
        %v1926 = vpop.f32.mrb[0].mxu0
        %v1927 = vpop.f32.mrb[0].mxu0
        %v1928 = vadd.f32 %v1696, %v1927
        %v1929 = vpop.f32.mrb[0].mxu0
        %1930 = vmatprep.mubr.bf16.mxu0 %v1568
        %1931 = vmatmul.mubr.bf16.gmra.mrb[0].mxu0 %v1567
        %v1932 = vpop.f32.mrb[0].mxu0
        %v1933 = vadd.f32 %v1696, %v1932
        %v1934 = vpop.f32.mrb[0].mxu0
        %v1935 = vpop.f32.mrb[0].mxu0
        %v1936 = vadd.f32 %v1696, %v1935
        %v1937 = vpop.f32.mrb[0].mxu0
        %1938 = vmatprep.mubr.bf16.mxu0 %v1572
        %1939 = vmatmul.mubr.bf16.gmra.mrb[0].mxu0 %v1571
        %v1940 = vpop.f32.mrb[0].mxu0
        %v1941 = vadd.f32 %v1696, %v1940
        %v1942 = vpop.f32.mrb[0].mxu0
        %v1943 = vpop.f32.mrb[0].mxu0
        %v1944 = vadd.f32 %v1696, %v1943
        %v1945 = vpop.f32.mrb[0].mxu0
        %1946 = vmatprep.mubr.bf16.mxu0 %v1576
        %1947 = vmatmul.mubr.bf16.gmra.mrb[0].mxu0 %v1575
        %v1948 = vpop.f32.mrb[0].mxu0
        %v1949 = vadd.f32 %v1696, %v1948
        %v1950 = vpop.f32.mrb[0].mxu0
        %v1951 = vpop.f32.mrb[0].mxu0
        %v1952 = vadd.f32 %v1696, %v1951
        %v1953 = vpop.f32.mrb[0].mxu0
        %1954 = vmatprep.mubr.bf16.mxu0 %v1580
        %1955 = vmatmul.mubr.bf16.gmra.mrb[0].mxu0 %v1579
        %v1956 = vpop.f32.mrb[0].mxu0
        %v1957 = vadd.f32 %v1696, %v1956
        %v1958 = vpop.f32.mrb[0].mxu0
        %v1959 = vpop.f32.mrb[0].mxu0
        %v1960 = vadd.f32 %v1696, %v1959
        %v1961 = vpop.f32.mrb[0].mxu0
        %1962 = vmatprep.mubr.bf16.mxu0 %v1584
        %1963 = vmatmul.mubr.bf16.gmra.mrb[0].mxu0 %v1583
        %v1964 = vpop.f32.mrb[0].mxu0
        %v1965 = vadd.f32 %v1696, %v1964
        %v1966 = vpop.f32.mrb[0].mxu0
        %v1967 = vpop.f32.mrb[0].mxu0
        %v1968 = vadd.f32 %v1696, %v1967
        %v1969 = vpop.f32.mrb[0].mxu0
        %1970 = vmatprep.mubr.bf16.mxu0 %v1588
        %1971 = vmatmul.mubr.bf16.gmra.mrb[0].mxu0 %v1587
        %v1972 = vpop.f32.mrb[0].mxu0
        %v1973 = vadd.f32 %v1696, %v1972
        %v1974 = vpop.f32.mrb[0].mxu0
        %v1975 = vpop.f32.mrb[0].mxu0
        %v1976 = vadd.f32 %v1696, %v1975
        %v1977 = vpop.f32.mrb[0].mxu0
        %1978 = vmatprep.mubr.bf16.mxu0 %v1592
        %1979 = vmatmul.mubr.bf16.gmra.mrb[0].mxu0 %v1591
        %v1980 = vpop.f32.mrb[0].mxu0
        %v1981 = vadd.f32 %v1696, %v1980
        %v1982 = vpop.f32.mrb[0].mxu0
        %v1983 = vpop.f32.mrb[0].mxu0
        %v1984 = vadd.f32 %v1696, %v1983
        %v1985 = vpop.f32.mrb[0].mxu0
        %1986 = vmatprep.mubr.bf16.mxu0 %v1596
        %1987 = vmatmul.mubr.bf16.gmra.mrb[0].mxu0 %v1595
        %v1988 = vpop.f32.mrb[0].mxu0
        %v1989 = vadd.f32 %v1696, %v1988
        %v1990 = vpop.f32.mrb[0].mxu0
        %v1991 = vpop.f32.mrb[0].mxu0
        %v1992 = vadd.f32 %v1696, %v1991
        %v1993 = vpop.f32.mrb[0].mxu0
        %1994 = vmatprep.mubr.bf16.mxu0 %v1600
        %1995 = vmatmul.mubr.bf16.gmra.mrb[0].mxu0 %v1599
        %v1996 = vpop.f32.mrb[0].mxu0
        %v1997 = vadd.f32 %v1696, %v1996
        %v1998 = vpop.f32.mrb[0].mxu0
        %v1999 = vpop.f32.mrb[0].mxu0
        %v2000 = vadd.f32 %v1696, %v1999
        %v2001 = vpop.f32.mrb[0].mxu0
        %2002 = vmatprep.mubr.bf16.mxu0 %v1604
        %2003 = vmatmul.mubr.bf16.gmra.mrb[0].mxu0 %v1603
        %v2004 = vpop.f32.mrb[0].mxu0
        %v2005 = vadd.f32 %v1696, %v2004
        %v2006 = vpop.f32.mrb[0].mxu0
        %v2007 = vpop.f32.mrb[0].mxu0
        %v2008 = vadd.f32 %v1696, %v2007
        %v2009 = vpop.f32.mrb[0].mxu0
        %2010 = vmatprep.mubr.bf16.mxu0 %v1608
        %2011 = vmatmul.mubr.bf16.gmra.mrb[0].mxu0 %v1607
        %v2012 = vpop.f32.mrb[0].mxu0
        %v2013 = vadd.f32 %v1696, %v2012
        %v2014 = vpop.f32.mrb[0].mxu0
        %v2015 = vpop.f32.mrb[0].mxu0
        %v2016 = vadd.f32 %v1696, %v2015
        %v2017 = vpop.f32.mrb[0].mxu0
        %2018 = vmatprep.mubr.bf16.mxu0 %v1612
        %2019 = vmatmul.mubr.bf16.gmra.mrb[0].mxu0 %v1611
        %v2020 = vpop.f32.mrb[0].mxu0
        %v2021 = vadd.f32 %v1696, %v2020
        %v2022 = vpop.f32.mrb[0].mxu0
        %v2023 = vpop.f32.mrb[0].mxu0
        %v2024 = vadd.f32 %v1696, %v2023
        %v2025 = vpop.f32.mrb[0].mxu0
        %2026 = vmatprep.mubr.bf16.mxu0 %v1616
        %2027 = vmatmul.mubr.bf16.gmra.mrb[0].mxu0 %v1615
        %v2028 = vpop.f32.mrb[0].mxu0
        %v2029 = vadd.f32 %v1696, %v2028
        %v2030 = vpop.f32.mrb[0].mxu0
        %v2031 = vpop.f32.mrb[0].mxu0
        %v2032 = vadd.f32 %v1696, %v2031
        %v2033 = vpop.f32.mrb[0].mxu0
        %2034 = vmatprep.mubr.bf16.mxu0 %v1620
        %2035 = vmatmul.mubr.bf16.gmra.mrb[0].mxu0 %v1619
        %v2036 = vpop.f32.mrb[0].mxu0
        %v2037 = vadd.f32 %v1696, %v2036
        %v2038 = vpop.f32.mrb[0].mxu0
        %v2039 = vpop.f32.mrb[0].mxu0
        %v2040 = vadd.f32 %v1696, %v2039
        %v2041 = vpop.f32.mrb[0].mxu0
        %2042 = vmatprep.mubr.bf16.mxu0 %v1624
        %2043 = vmatmul.mubr.bf16.gmra.mrb[0].mxu0 %v1623
        %v2044 = vpop.f32.mrb[0].mxu0
        %v2045 = vadd.f32 %v1696, %v2044
        %v2046 = vpop.f32.mrb[0].mxu0
        %v2047 = vpop.f32.mrb[0].mxu0
        %v2048 = vadd.f32 %v1696, %v2047
        %v2049 = vpop.f32.mrb[0].mxu0
        %2050 = vdwg.mxu0
        %2051 = vmatprep.subr.bf16.mxu0 0
        %2052 = vmatpush1.bf16.msra.mxu0 %v1842
        %2053 = vmatprep.subr.bf16.mxu0 0
        %2054 = vmatpush1.bf16.msra.mxu0 %v1843
        %2055 = vmatprep.subr.bf16.mxu0 0
        %2056 = vmatpush1.bf16.msra.mxu0 %v1844
        %2057 = vmatprep.subr.bf16.mxu0 0
        %2058 = vmatpush1.bf16.msra.mxu0 %v1845
        %2059 = vmatprep.subr.bf16.mxu0 0
        %2060 = vmatpush1.bf16.msra.mxu0 %v1846
        %2061 = vmatprep.subr.bf16.mxu0 0
        %2062 = vmatpush1.bf16.msra.mxu0 %v1847
        %2063 = vmatprep.subr.bf16.mxu0 0
        %2064 = vmatpush1.bf16.msra.mxu0 %v1848
        %2065 = vmatprep.subr.bf16.mxu0 0
        %2066 = vmatpush1.bf16.msra.mxu0 %v1849
        %2067 = vmatprep.subr.bf16.mxu0 0
        %2068 = vmatpush1.bf16.msra.mxu0 %v1850
        %2069 = vmatprep.subr.bf16.mxu0 0
        %2070 = vmatpush1.bf16.msra.mxu0 %v1851
        %2071 = vmatprep.subr.bf16.mxu0 0
        %2072 = vmatpush1.bf16.msra.mxu0 %v1852
        %2073 = vmatprep.subr.bf16.mxu0 0
        %2074 = vmatpush1.bf16.msra.mxu0 %v1853
        %2075 = vmatprep.subr.bf16.mxu0 0
        %2076 = vmatpush1.bf16.msra.mxu0 %v1854
        %2077 = vmatprep.subr.bf16.mxu0 0
        %2078 = vmatpush1.bf16.msra.mxu0 %v1855
        %2079 = vmatprep.subr.bf16.mxu0 0
        %2080 = vmatpush1.bf16.msra.mxu0 %v1856
        %2081 = vmatprep.subr.bf16.mxu0 0
        %2082 = vmatpush1.bf16.msra.mxu0 %v1857
        %2083 = vmatprep.mubr.bf16.mxu0 %v1566
        %2084 = vmatmul.mubr.bf16.gmra.mrb[0].mxu0 %v1565
        %v2085 = vpop.f32.mrb[0].mxu0
        %v2086 = vadd.f32 %v1925, %v2085
        %v2087 = vpop.f32.mrb[0].mxu0
        %v2088 = vpop.f32.mrb[0].mxu0
        %v2089 = vadd.f32 %v1928, %v2088
        %v2090 = vpop.f32.mrb[0].mxu0
        %2091 = vmatprep.mubr.bf16.mxu0 %v1570
        %2092 = vmatmul.mubr.bf16.gmra.mrb[0].mxu0 %v1569
        %v2093 = vpop.f32.mrb[0].mxu0
        %v2094 = vadd.f32 %v1933, %v2093
        %v2095 = vpop.f32.mrb[0].mxu0
        %v2096 = vpop.f32.mrb[0].mxu0
        %v2097 = vadd.f32 %v1936, %v2096
        %v2098 = vpop.f32.mrb[0].mxu0
        %2099 = vmatprep.mubr.bf16.mxu0 %v1574
        %2100 = vmatmul.mubr.bf16.gmra.mrb[0].mxu0 %v1573
        %v2101 = vpop.f32.mrb[0].mxu0
        %v2102 = vadd.f32 %v1941, %v2101
        %v2103 = vpop.f32.mrb[0].mxu0
        %v2104 = vpop.f32.mrb[0].mxu0
        %v2105 = vadd.f32 %v1944, %v2104
        %v2106 = vpop.f32.mrb[0].mxu0
        %2107 = vmatprep.mubr.bf16.mxu0 %v1578
        %2108 = vmatmul.mubr.bf16.gmra.mrb[0].mxu0 %v1577
        %v2109 = vpop.f32.mrb[0].mxu0
        %v2110 = vadd.f32 %v1949, %v2109
        %v2111 = vpop.f32.mrb[0].mxu0
        %v2112 = vpop.f32.mrb[0].mxu0
        %v2113 = vadd.f32 %v1952, %v2112
        %v2114 = vpop.f32.mrb[0].mxu0
        %2115 = vmatprep.mubr.bf16.mxu0 %v1582
        %2116 = vmatmul.mubr.bf16.gmra.mrb[0].mxu0 %v1581
        %v2117 = vpop.f32.mrb[0].mxu0
        %v2118 = vadd.f32 %v1957, %v2117
        %v2119 = vpop.f32.mrb[0].mxu0
        %v2120 = vpop.f32.mrb[0].mxu0
        %v2121 = vadd.f32 %v1960, %v2120
        %v2122 = vpop.f32.mrb[0].mxu0
        %2123 = vmatprep.mubr.bf16.mxu0 %v1586
        %2124 = vmatmul.mubr.bf16.gmra.mrb[0].mxu0 %v1585
        %v2125 = vpop.f32.mrb[0].mxu0
        %v2126 = vadd.f32 %v1965, %v2125
        %v2127 = vpop.f32.mrb[0].mxu0
        %v2128 = vpop.f32.mrb[0].mxu0
        %v2129 = vadd.f32 %v1968, %v2128
        %v2130 = vpop.f32.mrb[0].mxu0
        %2131 = vmatprep.mubr.bf16.mxu0 %v1590
        %2132 = vmatmul.mubr.bf16.gmra.mrb[0].mxu0 %v1589
        %v2133 = vpop.f32.mrb[0].mxu0
        %v2134 = vadd.f32 %v1973, %v2133
        %v2135 = vpop.f32.mrb[0].mxu0
        %v2136 = vpop.f32.mrb[0].mxu0
        %v2137 = vadd.f32 %v1976, %v2136
        %v2138 = vpop.f32.mrb[0].mxu0
        %2139 = vmatprep.mubr.bf16.mxu0 %v1594
        %2140 = vmatmul.mubr.bf16.gmra.mrb[0].mxu0 %v1593
        %v2141 = vpop.f32.mrb[0].mxu0
        %v2142 = vadd.f32 %v1981, %v2141
        %v2143 = vpop.f32.mrb[0].mxu0
        %v2144 = vpop.f32.mrb[0].mxu0
        %v2145 = vadd.f32 %v1984, %v2144
        %v2146 = vpop.f32.mrb[0].mxu0
        %2147 = vmatprep.mubr.bf16.mxu0 %v1598
        %2148 = vmatmul.mubr.bf16.gmra.mrb[0].mxu0 %v1597
        %v2149 = vpop.f32.mrb[0].mxu0
        %v2150 = vadd.f32 %v1989, %v2149
        %v2151 = vpop.f32.mrb[0].mxu0
        %v2152 = vpop.f32.mrb[0].mxu0
        %v2153 = vadd.f32 %v1992, %v2152
        %v2154 = vpop.f32.mrb[0].mxu0
        %2155 = vmatprep.mubr.bf16.mxu0 %v1602
        %2156 = vmatmul.mubr.bf16.gmra.mrb[0].mxu0 %v1601
        %v2157 = vpop.f32.mrb[0].mxu0
        %v2158 = vadd.f32 %v1997, %v2157
        %v2159 = vpop.f32.mrb[0].mxu0
        %v2160 = vpop.f32.mrb[0].mxu0
        %v2161 = vadd.f32 %v2000, %v2160
        %v2162 = vpop.f32.mrb[0].mxu0
        %2163 = vmatprep.mubr.bf16.mxu0 %v1606
        %2164 = vmatmul.mubr.bf16.gmra.mrb[0].mxu0 %v1605
        %v2165 = vpop.f32.mrb[0].mxu0
        %v2166 = vadd.f32 %v2005, %v2165
        %v2167 = vpop.f32.mrb[0].mxu0
        %v2168 = vpop.f32.mrb[0].mxu0
        %v2169 = vadd.f32 %v2008, %v2168
        %v2170 = vpop.f32.mrb[0].mxu0
        %2171 = vmatprep.mubr.bf16.mxu0 %v1610
        %2172 = vmatmul.mubr.bf16.gmra.mrb[0].mxu0 %v1609
        %v2173 = vpop.f32.mrb[0].mxu0
        %v2174 = vadd.f32 %v2013, %v2173
        %v2175 = vpop.f32.mrb[0].mxu0
        %v2176 = vpop.f32.mrb[0].mxu0
        %v2177 = vadd.f32 %v2016, %v2176
        %v2178 = vpop.f32.mrb[0].mxu0
        %2179 = vmatprep.mubr.bf16.mxu0 %v1614
        %2180 = vmatmul.mubr.bf16.gmra.mrb[0].mxu0 %v1613
        %v2181 = vpop.f32.mrb[0].mxu0
        %v2182 = vadd.f32 %v2021, %v2181
        %v2183 = vpop.f32.mrb[0].mxu0
        %v2184 = vpop.f32.mrb[0].mxu0
        %v2185 = vadd.f32 %v2024, %v2184
        %v2186 = vpop.f32.mrb[0].mxu0
        %2187 = vmatprep.mubr.bf16.mxu0 %v1618
        %2188 = vmatmul.mubr.bf16.gmra.mrb[0].mxu0 %v1617
        %v2189 = vpop.f32.mrb[0].mxu0
        %v2190 = vadd.f32 %v2029, %v2189
        %v2191 = vpop.f32.mrb[0].mxu0
        %v2192 = vpop.f32.mrb[0].mxu0
        %v2193 = vadd.f32 %v2032, %v2192
        %v2194 = vpop.f32.mrb[0].mxu0
        %2195 = vmatprep.mubr.bf16.mxu0 %v1622
        %2196 = vmatmul.mubr.bf16.gmra.mrb[0].mxu0 %v1621
        %v2197 = vpop.f32.mrb[0].mxu0
        %v2198 = vadd.f32 %v2037, %v2197
        %v2199 = vpop.f32.mrb[0].mxu0
        %v2200 = vpop.f32.mrb[0].mxu0
        %v2201 = vadd.f32 %v2040, %v2200
        %v2202 = vpop.f32.mrb[0].mxu0
        %2203 = vmatprep.mubr.bf16.mxu0 %v1626
        %2204 = vmatmul.mubr.bf16.gmra.mrb[0].mxu0 %v1625
        %v2205 = vpop.f32.mrb[0].mxu0
        %v2206 = vadd.f32 %v2045, %v2205
        %v2207 = vpop.f32.mrb[0].mxu0
        %v2208 = vpop.f32.mrb[0].mxu0
        %v2209 = vadd.f32 %v2048, %v2208
        %v2210 = vpop.f32.mrb[0].mxu0
        %2211 = vdwg.mxu0
        %2212 = vst [vmem:[%s271] sm:$0xff] %v2086
        %2213 = vst [vmem:[%s271 + $0x8] sm:$0xff] %v2089
        %2214 = vst [vmem:[%s271 + $0x10] sm:$0xff] %v2094
        %2215 = vst [vmem:[%s271 + $0x18] sm:$0xff] %v2097
        %2216 = vst [vmem:[%s271 + $0x20] sm:$0xff] %v2102
        %2217 = vst [vmem:[%s271 + $0x28] sm:$0xff] %v2105
        %2218 = vst [vmem:[%s271 + $0x30] sm:$0xff] %v2110
        %2219 = vst [vmem:[%s271 + $0x38] sm:$0xff] %v2113
        %2220 = vst [vmem:[%s271 + $0x40] sm:$0xff] %v2118
        %2221 = vst [vmem:[%s271 + $0x48] sm:$0xff] %v2121
        %2222 = vst [vmem:[%s271 + $0x50] sm:$0xff] %v2126
        %2223 = vst [vmem:[%s271 + $0x58] sm:$0xff] %v2129
        %2224 = vst [vmem:[%s271 + $0x60] sm:$0xff] %v2134
        %2225 = vst [vmem:[%s271 + $0x68] sm:$0xff] %v2137
        %2226 = vst [vmem:[%s271 + $0x70] sm:$0xff] %v2142
        %2227 = vst [vmem:[%s271 + $0x78] sm:$0xff] %v2145
        %2228 = vst [vmem:[%s271 + $0x80] sm:$0xff] %v2150
        %2229 = vst [vmem:[%s271 + $0x88] sm:$0xff] %v2153
        %2230 = vst [vmem:[%s271 + $0x90] sm:$0xff] %v2158
        %2231 = vst [vmem:[%s271 + $0x98] sm:$0xff] %v2161
        %2232 = vst [vmem:[%s271 + $0xa0] sm:$0xff] %v2166
        %2233 = vst [vmem:[%s271 + $0xa8] sm:$0xff] %v2169
        %2234 = vst [vmem:[%s271 + $0xb0] sm:$0xff] %v2174
        %2235 = vst [vmem:[%s271 + $0xb8] sm:$0xff] %v2177
        %2236 = vst [vmem:[%s271 + $0xc0] sm:$0xff] %v2182
        %2237 = vst [vmem:[%s271 + $0xc8] sm:$0xff] %v2185
        %2238 = vst [vmem:[%s271 + $0xd0] sm:$0xff] %v2190
        %2239 = vst [vmem:[%s271 + $0xd8] sm:$0xff] %v2193
        %2240 = vst [vmem:[%s271 + $0xe0] sm:$0xff] %v2198
        %2241 = vst [vmem:[%s271 + $0xe8] sm:$0xff] %v2201
        %2242 = vst [vmem:[%s271 + $0xf0] sm:$0xff] %v2206
        %2243 = vst [vmem:[%s271 + $0xf8] sm:$0xff] %v2209
        %s2244 = sand.u32 %s141, 1
        %s2245 = scalar_lea.sflag [#allocation4], %s2244
        %s2246 = sand.u32 %s141, 1
        %s2247 = smul.addr %s2246, 256
        %s2248 = scalar_lea.vmem [#allocation8], %s2247
        // Predicated region
        $region53: #{tpu_custom_call.1} parent=39 // pred_check
          %p2249 = pneg %p151
        $region54: #{tpu_custom_call.1} parent=39 // pred_check_branch
          %2251 = sbr.rel (%p2249) target = $region56
        $region55: #{tpu_custom_call.1} parent=39 // pred_region
          %s2252 = smul.u32 32, %s23
          %s2254 = ssub.s32 4096, 4096
          %2255 = vsyncadd %s2245, %s2254
          %s2256 = smul.addr %s2252, 128
          %s2257 = scalar_lea.hbm %s5, %s2256
          %s2258 = sshll.u32 %s2248, 4
          %s2259 = int_to_ptr.vmem [resolvable:$true] %s2258
          %2264 = dma.vmem_to_hbm [thread:$0]  %s2259, 4096, %s2257, %s2245, 128, 128, 8
        $region56: #{tpu_custom_call.1} parent=39 // pred_fallthru
          _
      $region40: #{tpu_custom_call.1} parent=5 // pred_fallthru
        _
      %p2265 = scmp.le.s32.totalorder 2, %s18
      // Predicated region
      $region57: #{tpu_custom_call.1} parent=5 // pred_check
        %p2266 = pneg %p2265
      $region58: #{tpu_custom_call.1} parent=5 // pred_check_branch
        %2268 = sbr.rel (%p2266) target = $region60
      $region59: #{tpu_custom_call.1} parent=5 // pred_region
        %s2269 = ssub.s32 %s18, 2
        // Predicated region
        $region61: #{tpu_custom_call.1} parent=59 // pred_check
          %p2270 = pneg %p157
        $region62: #{tpu_custom_call.1} parent=59 // pred_check_branch
          %2272 = sbr.rel (%p2270) target = $region64
        $region63: #{tpu_custom_call.1} parent=59 // pred_region
          %s2273 = sand.u32 %s142, 1
          %s2274 = scalar_lea.sflag [#allocation4], %s2273
          %s2275 = sand.u32 %s142, 1
          %s2276 = smul.addr %s2275, 256
          %s2277 = scalar_lea.vmem [#allocation8], %s2276
          %2278 = dma.done %s2274, 4096
        $region64: #{tpu_custom_call.1} parent=59 // pred_fallthru
          _
      $region60: #{tpu_custom_call.1} parent=5 // pred_fallthru
        _
    $region6: #{tpu_custom_call.1} parent=1 // loop_footer
      %s22 = sadd.s32 1, %s18
    $region7: #{tpu_custom_call.1} parent=1 // loop_footer_branch
      %17 = sbr.rel target = $region3
    $region8: #{tpu_custom_call.1} parent=1 // loop_exit
      _
    %2279 = vsyncpa [#allocation3], 1
    %s2280 = scalar_lea.sflag [#allocation3], 1
    %2281 = vsyncpa %s2280, 1
    %2282 = vsyncpa [#allocation6], 1
    %2283 = vsyncpa [#allocation4], 1
    %s2284 = scalar_lea.sflag [#allocation4], 1
    %2285 = vsyncpa %s2284, 1

</llo_original>
